<compile_context>
chip_gen: v5e
topology: v5e:2x2
jax: 0.10.0
libtpu: 0.0.40
codegen_flags: <defaults>
</compile_context>

<pallas_src>
import functools

import jax
import jax.numpy as jnp
from jax import lax
from jax.experimental import pallas as pl
from jax.experimental.pallas import tpu as pltpu


# ------------------------------ fused kernel -------------------------------

def _fused_tcn_kernel(*refs, e_layers, dilations, ksize, seq_len, pred_len,
                      pad_rows, d_model, batch_tile, use_fused_taps):
    # refs: x, emb_w, emb_b, [w1,b1,w2,b2]*e_layers, proj_w, proj_b,
    #       out, scratchA, scratchB
    idx = 0
    x_ref = refs[idx]; idx += 1
    emb_w_ref = refs[idx]; idx += 1
    emb_b_ref = refs[idx]; idx += 1
    layer_refs = []
    for _ in range(e_layers):
        layer_refs.append(tuple(refs[idx:idx + 4]))
        idx += 4
    proj_w_ref = refs[idx]; idx += 1
    proj_b_ref = refs[idx]; idx += 1
    o_ref = refs[idx]; idx += 1
    buf_a = refs[idx]; idx += 1
    buf_b = refs[idx]; idx += 1

    f32, bf16 = jnp.float32, jnp.bfloat16
    S = seq_len
    Bt = batch_tile
    seg = pad_rows + S            # rows per sequence (halo + activation)
    R = Bt * seg                  # total scratch rows
    M = R - pad_rows              # rows processed by each fused conv matmul

    # (1) Zero ONLY the halo rows; activation rows are always written before
    # they are read.  Re-done each grid step (cheap) -> safe under megacore
    # grid splitting where the first iteration on a core has program_id != 0.
    zhalo = jnp.zeros((pad_rows, d_model), f32)
    for i in range(Bt):
        buf_a[i * seg: i * seg + pad_rows, :] = zhalo
        buf_b[i * seg: i * seg + pad_rows, :] = zhalo

    # (2) enc_embedding: (S, enc_in) @ (enc_in, d_model) + b, per sequence.
    emb_b = emb_b_ref[...]
    for i in range(Bt):
        h0 = jnp.dot(x_ref[i].astype(bf16), emb_w_ref[...],
                     preferred_element_type=f32) + emb_b
        buf_a[i * seg + pad_rows: i * seg + pad_rows + S, :] = h0

    # (3) Dilated causal conv + bias + ReLU over ALL Bt sequences at once.
    # The per-sequence halo rows read as zeros -> causal left padding is free,
    # and the (Bt-1) halo-row outputs are garbage that is never written back.
    def dilated_conv_relu(src_ref, w_ref, b_ref, dilation):
        pad = (ksize - 1) * dilation
        starts = [pad_rows - pad + k * dilation for k in range(ksize)]
        if use_fused_taps:
            # im2col: one matmul with contraction dim K*d_model.
            xcat = jnp.concatenate(
                [src_ref[s: s + M, :] for s in starts], axis=-1).astype(bf16)
            acc = jnp.dot(xcat, w_ref[...], preferred_element_type=f32)
        else:
            # K per-tap dots; accumulator initialized from the k=0 tap.
            acc = jnp.dot(src_ref[starts[0]: starts[0] + M, :].astype(bf16),
                          w_ref[0:d_model, :], preferred_element_type=f32)
            for k in range(1, ksize):
                acc = acc + jnp.dot(
                    src_ref[starts[k]: starts[k] + M, :].astype(bf16),
                    w_ref[k * d_model: (k + 1) * d_model, :],
                    preferred_element_type=f32)
        return jnp.maximum(acc + b_ref[...], 0.0)

    # TemporalConvNet: h1 = relu(conv1(x)); h2 = relu(conv2(h1));
    #                  x  = relu(h2 + x)          (dropout = identity at eval)
    for l in range(e_layers):
        w1_ref, b1_ref, w2_ref, b2_ref = layer_refs[l]
        d = dilations[l]
        h1 = dilated_conv_relu(buf_a, w1_ref, b1_ref, d)
        for i in range(Bt):
            buf_b[i * seg + pad_rows: i * seg + pad_rows + S, :] = \
                h1[i * seg: i * seg + S, :]
        h2 = dilated_conv_relu(buf_b, w2_ref, b2_ref, d)
        res = buf_a[pad_rows:R, :]                 # sunk residual read
        out_full = jnp.maximum(h2 + res, 0.0)
        for i in range(Bt):
            buf_a[i * seg + pad_rows: i * seg + pad_rows + S, :] = \
                out_full[i * seg: i * seg + S, :]

    # (4) projection (Linear) on only the last pred_len steps of each sequence.
    proj_b = proj_b_ref[...]
    for i in range(Bt):
        tail = i * seg + pad_rows + S - pred_len
        hp = buf_a[tail: tail + pred_len, :].astype(bf16)
        o_ref[i] = (jnp.dot(hp, proj_w_ref[...], preferred_element_type=f32)
                    + proj_b).astype(o_ref.dtype)


# ------------------------------ model wrapper ------------------------------

def prepare_params(raw):
    """One-time layout/dtype prep (call at parameter-load time):
    conv weights (Cout, Cin, K) -> (K*Cin, Cout) bf16; linear weights bf16;
    biases (1, C) f32."""
    def _w(a):
        return a.astype(jnp.bfloat16)

    p = {
        "emb_w": _w(raw["emb_w"]),
        "emb_b": raw["emb_b"].reshape(1, -1).astype(jnp.float32),
        "proj_w": _w(raw["proj_w"]),
        "proj_b": raw["proj_b"].reshape(1, -1).astype(jnp.float32),
        "tcn": [],
    }
    for layer in raw["tcn"]:
        k = layer["w1"].shape[2]
        cin1 = layer["w1"].shape[1]
        cin2 = layer["w2"].shape[1]
        p["tcn"].append({
            "dilation": int(layer["dilation"]),
            "w1": _w(jnp.transpose(layer["w1"], (2, 1, 0)).reshape(k * cin1, -1)),
            "b1": layer["b1"].reshape(1, -1).astype(jnp.float32),
            "w2": _w(jnp.transpose(layer["w2"], (2, 1, 0)).reshape(k * cin2, -1)),
            "b2": layer["b2"].reshape(1, -1).astype(jnp.float32),
        })
    return p


def model_forward(params, x_enc, x_mark_enc, x_dec, x_mark_dec, *,
                  kernel_size, pred_len, batch_tile=None):
    # x_mark_enc / x_dec / x_mark_dec are unused by the PyTorch forward.
    del x_mark_enc, x_dec, x_mark_dec
    B, S, enc_in = x_enc.shape
    d_model = params["emb_w"].shape[1]
    c_out = params["proj_w"].shape[1]
    layers = params["tcn"]
    e_layers = len(layers)
    dilations = tuple(int(l["dilation"]) for l in layers)
    K = kernel_size
    maxpad = (K - 1) * max(dilations)
    pad_rows = ((maxpad + 7) // 8) * 8     # per-sequence halo, sublane aligned

    # Batch folding: default keeps the grid length a multiple of 2 when
    # possible so v7x's two TensorCores both get work; Bt > 1 raises the
    # matmul M dim and amortizes per-grid-step overhead.
    if batch_tile is None:
        batch_tile = B // 2 if (B % 2 == 0 and B >= 4) else 1
    assert B % batch_tile == 0, (B, batch_tile)
    Bt = batch_tile
    grid_len = B // Bt

    # im2col tap fusion is only a cheap lane-concat when d_model is 128-aligned.
    use_fused_taps = (d_model % 128 == 0)

    kern = functools.partial(
        _fused_tcn_kernel, e_layers=e_layers, dilations=dilations, ksize=K,
        seq_len=S, pred_len=pred_len, pad_rows=pad_rows, d_model=d_model,
        batch_tile=Bt, use_fused_taps=use_fused_taps)

    in_specs = [
        pl.BlockSpec((Bt, S, enc_in), lambda b: (b, 0, 0)),
        pl.BlockSpec(params["emb_w"].shape, lambda b: (0, 0)),
        pl.BlockSpec(params["emb_b"].shape, lambda b: (0, 0)),
    ]
    args = [x_enc, params["emb_w"], params["emb_b"]]
    for layer in layers:
        in_specs += [
            pl.BlockSpec(layer["w1"].shape, lambda b: (0, 0)),
            pl.BlockSpec(layer["b1"].shape, lambda b: (0, 0)),
            pl.BlockSpec(layer["w2"].shape, lambda b: (0, 0)),
            pl.BlockSpec(layer["b2"].shape, lambda b: (0, 0)),
        ]
        args += [layer["w1"], layer["b1"], layer["w2"], layer["b2"]]
    in_specs += [
        pl.BlockSpec(params["proj_w"].shape, lambda b: (0, 0)),
        pl.BlockSpec(params["proj_b"].shape, lambda b: (0, 0)),
    ]
    args += [params["proj_w"], params["proj_b"]]

    # Explicit VMEM budget from the real footprint (double-buffered blocks +
    # scratch + slack), clamped to a value safe on v5e/v6e/v7x.
    weight_bytes = sum(int(a.size) * a.dtype.itemsize for a in args[1:])
    block_bytes = (Bt * S * enc_in + Bt * pred_len * c_out) * 4
    scratch_bytes = 2 * Bt * (pad_rows + S) * d_model * 4
    est = 2 * (weight_bytes + block_bytes) + scratch_bytes + (2 << 20)
    vmem_limit = int(min(64 << 20, max(32 << 20, est)))
    # NOTE: at production d_model, grid-invariant weight BlockSpecs could also
    # use pipeline_mode=pl.Buffered(1) to avoid double-buffering them.

    return pl.pallas_call(
        kern,
        out_shape=jax.ShapeDtypeStruct((B, pred_len, c_out), jnp.float32),
        grid=(grid_len,),
        in_specs=in_specs,
        out_specs=pl.BlockSpec((Bt, pred_len, c_out), lambda b: (b, 0, 0)),
        scratch_shapes=[
            pltpu.VMEM((Bt * (pad_rows + S), d_model), jnp.float32),
            pltpu.VMEM((Bt * (pad_rows + S), d_model), jnp.float32),
        ],
        compiler_params=pltpu.CompilerParams(
            dimension_semantics=("parallel",),
            vmem_limit_bytes=vmem_limit),
    )(*args)


# ------------------------- pure-JAX reference model ------------------------

def _conv1d_chomp_ref(x_ncw, w_oik, b, dilation, padding):
    out = lax.conv_general_dilated(
        x_ncw, w_oik, window_strides=(1,), padding=[(padding, padding)],
        rhs_dilation=(dilation,), dimension_numbers=("NCH", "OIH", "NCH"))
    out = out + b[None, :, None]
    return out[:, :, : x_ncw.shape[2]]   # Chomp1d


def reference_forward(raw_params, x_enc, *, kernel_size, pred_len):
    h = x_enc @ raw_params["emb_w"] + raw_params["emb_b"]    # (B, S, D)
    h = jnp.transpose(h, (0, 2, 1))                          # (B, D, S) NCW
    for layer in raw_params["tcn"]:
        d = layer["dilation"]
        p = (kernel_size - 1) * d
        res = h
        h1 = jnp.maximum(_conv1d_chomp_ref(h, layer["w1"], layer["b1"], d, p), 0.0)
        h2 = jnp.maximum(_conv1d_chomp_ref(h1, layer["w2"], layer["b2"], d, p), 0.0)
        h = jnp.maximum(h2 + res, 0.0)
    h = jnp.transpose(h, (0, 2, 1))                          # (B, S, D)
    out = h @ raw_params["proj_w"] + raw_params["proj_b"]
    return out[:, -pred_len:, :]


# ----------------------------------- main -----------------------------------

if __name__ == "__main__":
    # Small synthetic config (mirrors the configs object fields actually used).
    enc_in, dec_in, c_out = 4, 4, 4
    d_model, e_layers = 32, 2
    seq_len, label_len, pred_len = 16, 8, 8
    kernel_size = 3
    B = 4   # folded 2 sequences per grid step -> grid=(2,) (both v7x TCs busy)

    key = jax.random.PRNGKey(0)
    ks = list(jax.random.split(key, 8 + 4 * e_layers))

    def _n(k, shape, std):
        return (std * jax.random.normal(k, shape)).astype(jnp.float32)

    raw_params = {
        "emb_w": _n(ks[0], (enc_in, d_model), 0.05),
        "emb_b": _n(ks[1], (d_model,), 0.05),
        "proj_w": _n(ks[2], (d_model, c_out), 0.05),
        "proj_b": _n(ks[3], (c_out,), 0.05),
        "tcn": [],
    }
    for i in range(e_layers):
        dilation = 2 ** i
        raw_params["tcn"].append({
            "dilation": dilation,
            # PyTorch Conv1d weight shape: (C_out, C_in, K); init normal(0, 0.01)
            "w1": _n(ks[4 + 4 * i + 0], (d_model, d_model, kernel_size), 0.01),
            "b1": _n(ks[4 + 4 * i + 1], (d_model,), 0.01),
            "w2": _n(ks[4 + 4 * i + 2], (d_model, d_model, kernel_size), 0.01),
            "b2": _n(ks[4 + 4 * i + 3], (d_model,), 0.01),
        })

    kx = jax.random.split(ks[-1], 4)
    x_enc = jax.random.normal(kx[0], (B, seq_len, enc_in), jnp.float32)
    x_mark_enc = jax.random.normal(kx[1], (B, seq_len, 4), jnp.float32)
    x_dec = jax.random.normal(kx[2], (B, label_len + pred_len, dec_in), jnp.float32)
    x_mark_dec = jax.random.normal(kx[3], (B, label_len + pred_len, 4), jnp.float32)

    # One-time parameter layout/dtype prep (kept out of the forward hot path).
    params = prepare_params(raw_params)

    out = model_forward(params, x_enc, x_mark_enc, x_dec, x_mark_dec,
                        kernel_size=kernel_size, pred_len=pred_len)
    out = jax.block_until_ready(out)

    ref = reference_forward(raw_params, x_enc, kernel_size=kernel_size,
                            pred_len=pred_len)
    assert out.shape == (B, pred_len, c_out), out.shape
    # bf16 MXU inputs vs f32 reference -> relaxed tolerance.
    assert jnp.allclose(out, ref, atol=2e-2, rtol=2e-2), \
        float(jnp.max(jnp.abs(out - ref)))

    print("KERNEL_OK")
</pallas_src>

<mosaic_0001>
module attributes {stable_mosaic.version = 11 : i64} {
  func.func @_fused_tcn_kernel(%arg0: i32, %arg1: memref<2x16x4xf32, #tpu.memory_space<vmem>>, %arg2: memref<4x32xbf16, #tpu.memory_space<vmem>>, %arg3: memref<1x32xf32, #tpu.memory_space<vmem>>, %arg4: memref<96x32xbf16, #tpu.memory_space<vmem>>, %arg5: memref<1x32xf32, #tpu.memory_space<vmem>>, %arg6: memref<96x32xbf16, #tpu.memory_space<vmem>>, %arg7: memref<1x32xf32, #tpu.memory_space<vmem>>, %arg8: memref<96x32xbf16, #tpu.memory_space<vmem>>, %arg9: memref<1x32xf32, #tpu.memory_space<vmem>>, %arg10: memref<96x32xbf16, #tpu.memory_space<vmem>>, %arg11: memref<1x32xf32, #tpu.memory_space<vmem>>, %arg12: memref<32x4xbf16, #tpu.memory_space<vmem>>, %arg13: memref<1x4xf32, #tpu.memory_space<vmem>>, %arg14: memref<2x8x4xf32, #tpu.memory_space<vmem>>, %arg15: memref<48x32xf32, #tpu.memory_space<vmem>>, %arg16: memref<48x32xf32, #tpu.memory_space<vmem>>) attributes {dimension_semantics = [#tpu.dimension_semantics<parallel>], iteration_bounds = array<i64: 2>, scalar_prefetch = 0 : i64, scratch_operands = 2 : i64, tpu.core_type = #tpu.core_type<tc>, window_params = [{transform_indices = @transform_0, window_bounds = array<i64: 2, 16, 4>}, {pipeline_mode = #tpu.pipeline_mode<synchronous>, transform_indices = @transform_1, window_bounds = array<i64: 4, 32>}, {pipeline_mode = #tpu.pipeline_mode<synchronous>, transform_indices = @transform_2, window_bounds = array<i64: 1, 32>}, {pipeline_mode = #tpu.pipeline_mode<synchronous>, transform_indices = @transform_3, window_bounds = array<i64: 96, 32>}, {pipeline_mode = #tpu.pipeline_mode<synchronous>, transform_indices = @transform_4, window_bounds = array<i64: 1, 32>}, {pipeline_mode = #tpu.pipeline_mode<synchronous>, transform_indices = @transform_5, window_bounds = array<i64: 96, 32>}, {pipeline_mode = #tpu.pipeline_mode<synchronous>, transform_indices = @transform_6, window_bounds = array<i64: 1, 32>}, {pipeline_mode = #tpu.pipeline_mode<synchronous>, transform_indices = @transform_7, window_bounds = array<i64: 96, 32>}, {pipeline_mode = #tpu.pipeline_mode<synchronous>, transform_indices = @transform_8, window_bounds = array<i64: 1, 32>}, {pipeline_mode = #tpu.pipeline_mode<synchronous>, transform_indices = @transform_9, window_bounds = array<i64: 96, 32>}, {pipeline_mode = #tpu.pipeline_mode<synchronous>, transform_indices = @transform_10, window_bounds = array<i64: 1, 32>}, {pipeline_mode = #tpu.pipeline_mode<synchronous>, transform_indices = @transform_11, window_bounds = array<i64: 32, 4>}, {pipeline_mode = #tpu.pipeline_mode<synchronous>, transform_indices = @transform_12, window_bounds = array<i64: 1, 4>}, {transform_indices = @transform_13, window_bounds = array<i64: 2, 8, 4>}]} {
    %cst = arith.constant 0.000000e+00 : f32
    %0 = vector.broadcast %cst : f32 to vector<8x32xf32>
    %c0 = arith.constant 0 : index
    %c0_0 = arith.constant 0 : index
    %1 = vector.load %arg15[%c0, %c0_0] : memref<48x32xf32, #tpu.memory_space<vmem>>, vector<8x32xf32>
    tpu.vector_store %arg15[%c0, %c0_0], %0 {strides = array<i32>} : memref<48x32xf32, #tpu.memory_space<vmem>>, vector<8x32xf32>,
    %c0_1 = arith.constant 0 : index
    %c0_2 = arith.constant 0 : index
    %2 = vector.load %arg16[%c0_1, %c0_2] : memref<48x32xf32, #tpu.memory_space<vmem>>, vector<8x32xf32>
    tpu.vector_store %arg16[%c0_1, %c0_2], %0 {strides = array<i32>} : memref<48x32xf32, #tpu.memory_space<vmem>>, vector<8x32xf32>,
    %c24 = arith.constant 24 : index
    %c0_3 = arith.constant 0 : index
    %3 = vector.load %arg15[%c24, %c0_3] : memref<48x32xf32, #tpu.memory_space<vmem>>, vector<8x32xf32>
    tpu.vector_store %arg15[%c24, %c0_3], %0 {strides = array<i32>} : memref<48x32xf32, #tpu.memory_space<vmem>>, vector<8x32xf32>,
    %c24_4 = arith.constant 24 : index
    %c0_5 = arith.constant 0 : index
    %4 = vector.load %arg16[%c24_4, %c0_5] : memref<48x32xf32, #tpu.memory_space<vmem>>, vector<8x32xf32>
    tpu.vector_store %arg16[%c24_4, %c0_5], %0 {strides = array<i32>} : memref<48x32xf32, #tpu.memory_space<vmem>>, vector<8x32xf32>,
    %c0_6 = arith.constant 0 : index
    %c0_7 = arith.constant 0 : index
    %5 = vector.load %arg3[%c0_6, %c0_7] : memref<1x32xf32, #tpu.memory_space<vmem>>, vector<1x32xf32>
    %c0_8 = arith.constant 0 : index
    %c0_9 = arith.constant 0 : index
    %c0_10 = arith.constant 0 : index
    %6 = vector.load %arg1[%c0_8, %c0_9, %c0_10] : memref<2x16x4xf32, #tpu.memory_space<vmem>>, vector<1x16x4xf32>
    %7 = vector.shape_cast %6 : vector<1x16x4xf32> to vector<16x4xf32>
    %8 = arith.truncf %7 : vector<16x4xf32> to vector<16x4xbf16>
    %c0_11 = arith.constant 0 : index
    %c0_12 = arith.constant 0 : index
    %9 = vector.load %arg2[%c0_11, %c0_12] : memref<4x32xbf16, #tpu.memory_space<vmem>>, vector<4x32xbf16>
    %cst_13 = arith.constant dense<0.000000e+00> : vector<16x32xf32>
    %10 = tpu.matmul %8, %9, %cst_13 {dimension_numbers = #tpu.dot_dimension_numbers<[1], [0], [0], [1], [0, 0, 1, 1], [], []>} : vector<16x4xbf16>, vector<4x32xbf16>, vector<16x32xf32> -> vector<16x32xf32>
    %11 = vector.broadcast %5 : vector<1x32xf32> to vector<16x32xf32>
    %12 = arith.addf %10, %11 : vector<16x32xf32>
    %c8 = arith.constant 8 : index
    %c0_14 = arith.constant 0 : index
    %13 = vector.load %arg15[%c8, %c0_14] : memref<48x32xf32, #tpu.memory_space<vmem>>, vector<16x32xf32>
    tpu.vector_store %arg15[%c8, %c0_14], %12 {strides = array<i32>} : memref<48x32xf32, #tpu.memory_space<vmem>>, vector<16x32xf32>,
    %c1 = arith.constant 1 : index
    %c0_15 = arith.constant 0 : index
    %c0_16 = arith.constant 0 : index
    %14 = vector.load %arg1[%c1, %c0_15, %c0_16] : memref<2x16x4xf32, #tpu.memory_space<vmem>>, vector<1x16x4xf32>
    %15 = vector.shape_cast %14 : vector<1x16x4xf32> to vector<16x4xf32>
    %16 = arith.truncf %15 : vector<16x4xf32> to vector<16x4xbf16>
    %c0_17 = arith.constant 0 : index
    %c0_18 = arith.constant 0 : index
    %17 = vector.load %arg2[%c0_17, %c0_18] : memref<4x32xbf16, #tpu.memory_space<vmem>>, vector<4x32xbf16>
    %cst_19 = arith.constant dense<0.000000e+00> : vector<16x32xf32>
    %18 = tpu.matmul %16, %17, %cst_19 {dimension_numbers = #tpu.dot_dimension_numbers<[1], [0], [0], [1], [0, 0, 1, 1], [], []>} : vector<16x4xbf16>, vector<4x32xbf16>, vector<16x32xf32> -> vector<16x32xf32>
    %19 = vector.broadcast %5 : vector<1x32xf32> to vector<16x32xf32>
    %20 = arith.addf %18, %19 : vector<16x32xf32>
    %c32 = arith.constant 32 : index
    %c0_20 = arith.constant 0 : index
    %21 = vector.load %arg15[%c32, %c0_20] : memref<48x32xf32, #tpu.memory_space<vmem>>, vector<16x32xf32>
    tpu.vector_store %arg15[%c32, %c0_20], %20 {strides = array<i32>} : memref<48x32xf32, #tpu.memory_space<vmem>>, vector<16x32xf32>,
    %c6 = arith.constant 6 : index
    %c0_21 = arith.constant 0 : index
    %22 = vector.load %arg15[%c6, %c0_21] : memref<48x32xf32, #tpu.memory_space<vmem>>, vector<40x32xf32>
    %23 = arith.truncf %22 : vector<40x32xf32> to vector<40x32xbf16>
    %c0_22 = arith.constant 0 : index
    %c0_23 = arith.constant 0 : index
    %24 = vector.load %arg4[%c0_22, %c0_23] : memref<96x32xbf16, #tpu.memory_space<vmem>>, vector<32x32xbf16>
    %cst_24 = arith.constant dense<0.000000e+00> : vector<40x32xf32>
    %25 = tpu.matmul %23, %24, %cst_24 {dimension_numbers = #tpu.dot_dimension_numbers<[1], [0], [0], [1], [0, 0, 1, 1], [], []>} : vector<40x32xbf16>, vector<32x32xbf16>, vector<40x32xf32> -> vector<40x32xf32>
    %c7 = arith.constant 7 : index
    %c0_25 = arith.constant 0 : index
    %26 = vector.load %arg15[%c7, %c0_25] : memref<48x32xf32, #tpu.memory_space<vmem>>, vector<40x32xf32>
    %27 = arith.truncf %26 : vector<40x32xf32> to vector<40x32xbf16>
    %c32_26 = arith.constant 32 : index
    %c0_27 = arith.constant 0 : index
    %28 = vector.load %arg4[%c32_26, %c0_27] : memref<96x32xbf16, #tpu.memory_space<vmem>>, vector<32x32xbf16>
    %cst_28 = arith.constant dense<0.000000e+00> : vector<40x32xf32>
    %29 = tpu.matmul %27, %28, %cst_28 {dimension_numbers = #tpu.dot_dimension_numbers<[1], [0], [0], [1], [0, 0, 1, 1], [], []>} : vector<40x32xbf16>, vector<32x32xbf16>, vector<40x32xf32> -> vector<40x32xf32>
    %30 = arith.addf %25, %29 : vector<40x32xf32>
    %c8_29 = arith.constant 8 : index
    %c0_30 = arith.constant 0 : index
    %31 = vector.load %arg15[%c8_29, %c0_30] : memref<48x32xf32, #tpu.memory_space<vmem>>, vector<40x32xf32>
    %32 = arith.truncf %31 : vector<40x32xf32> to vector<40x32xbf16>
    %c64 = arith.constant 64 : index
    %c0_31 = arith.constant 0 : index
    %33 = vector.load %arg4[%c64, %c0_31] : memref<96x32xbf16, #tpu.memory_space<vmem>>, vector<32x32xbf16>
    %cst_32 = arith.constant dense<0.000000e+00> : vector<40x32xf32>
    %34 = tpu.matmul %32, %33, %cst_32 {dimension_numbers = #tpu.dot_dimension_numbers<[1], [0], [0], [1], [0, 0, 1, 1], [], []>} : vector<40x32xbf16>, vector<32x32xbf16>, vector<40x32xf32> -> vector<40x32xf32>
    %35 = arith.addf %30, %34 : vector<40x32xf32>
    %c0_33 = arith.constant 0 : index
    %c0_34 = arith.constant 0 : index
    %36 = vector.load %arg5[%c0_33, %c0_34] : memref<1x32xf32, #tpu.memory_space<vmem>>, vector<1x32xf32>
    %37 = vector.broadcast %36 : vector<1x32xf32> to vector<40x32xf32>
    %38 = arith.addf %35, %37 : vector<40x32xf32>
    %cst_35 = arith.constant 0.000000e+00 : f32
    %39 = vector.broadcast %cst_35 : f32 to vector<40x32xf32>
    %40 = arith.maximumf %38, %39 : vector<40x32xf32>
    %41 = vector.extract_strided_slice %40 {offsets = [0, 0], sizes = [16, 32], strides = [1, 1]} : vector<40x32xf32> to vector<16x32xf32>
    %c8_36 = arith.constant 8 : index
    %c0_37 = arith.constant 0 : index
    %42 = vector.load %arg16[%c8_36, %c0_37] : memref<48x32xf32, #tpu.memory_space<vmem>>, vector<16x32xf32>
    tpu.vector_store %arg16[%c8_36, %c0_37], %41 {strides = array<i32>} : memref<48x32xf32, #tpu.memory_space<vmem>>, vector<16x32xf32>,
    %43 = vector.extract_strided_slice %40 {offsets = [24, 0], sizes = [16, 32], strides = [1, 1]} : vector<40x32xf32> to vector<16x32xf32>
    %c32_38 = arith.constant 32 : index
    %c0_39 = arith.constant 0 : index
    %44 = vector.load %arg16[%c32_38, %c0_39] : memref<48x32xf32, #tpu.memory_space<vmem>>, vector<16x32xf32>
    tpu.vector_store %arg16[%c32_38, %c0_39], %43 {strides = array<i32>} : memref<48x32xf32, #tpu.memory_space<vmem>>, vector<16x32xf32>,
    %c6_40 = arith.constant 6 : index
    %c0_41 = arith.constant 0 : index
    %45 = vector.load %arg16[%c6_40, %c0_41] : memref<48x32xf32, #tpu.memory_space<vmem>>, vector<40x32xf32>
    %46 = arith.truncf %45 : vector<40x32xf32> to vector<40x32xbf16>
    %c0_42 = arith.constant 0 : index
    %c0_43 = arith.constant 0 : index
    %47 = vector.load %arg6[%c0_42, %c0_43] : memref<96x32xbf16, #tpu.memory_space<vmem>>, vector<32x32xbf16>
    %cst_44 = arith.constant dense<0.000000e+00> : vector<40x32xf32>
    %48 = tpu.matmul %46, %47, %cst_44 {dimension_numbers = #tpu.dot_dimension_numbers<[1], [0], [0], [1], [0, 0, 1, 1], [], []>} : vector<40x32xbf16>, vector<32x32xbf16>, vector<40x32xf32> -> vector<40x32xf32>
    %c7_45 = arith.constant 7 : index
    %c0_46 = arith.constant 0 : index
    %49 = vector.load %arg16[%c7_45, %c0_46] : memref<48x32xf32, #tpu.memory_space<vmem>>, vector<40x32xf32>
    %50 = arith.truncf %49 : vector<40x32xf32> to vector<40x32xbf16>
    %c32_47 = arith.constant 32 : index
    %c0_48 = arith.constant 0 : index
    %51 = vector.load %arg6[%c32_47, %c0_48] : memref<96x32xbf16, #tpu.memory_space<vmem>>, vector<32x32xbf16>
    %cst_49 = arith.constant dense<0.000000e+00> : vector<40x32xf32>
    %52 = tpu.matmul %50, %51, %cst_49 {dimension_numbers = #tpu.dot_dimension_numbers<[1], [0], [0], [1], [0, 0, 1, 1], [], []>} : vector<40x32xbf16>, vector<32x32xbf16>, vector<40x32xf32> -> vector<40x32xf32>
    %53 = arith.addf %48, %52 : vector<40x32xf32>
    %c8_50 = arith.constant 8 : index
    %c0_51 = arith.constant 0 : index
    %54 = vector.load %arg16[%c8_50, %c0_51] : memref<48x32xf32, #tpu.memory_space<vmem>>, vector<40x32xf32>
    %55 = arith.truncf %54 : vector<40x32xf32> to vector<40x32xbf16>
    %c64_52 = arith.constant 64 : index
    %c0_53 = arith.constant 0 : index
    %56 = vector.load %arg6[%c64_52, %c0_53] : memref<96x32xbf16, #tpu.memory_space<vmem>>, vector<32x32xbf16>
    %cst_54 = arith.constant dense<0.000000e+00> : vector<40x32xf32>
    %57 = tpu.matmul %55, %56, %cst_54 {dimension_numbers = #tpu.dot_dimension_numbers<[1], [0], [0], [1], [0, 0, 1, 1], [], []>} : vector<40x32xbf16>, vector<32x32xbf16>, vector<40x32xf32> -> vector<40x32xf32>
    %58 = arith.addf %53, %57 : vector<40x32xf32>
    %c0_55 = arith.constant 0 : index
    %c0_56 = arith.constant 0 : index
    %59 = vector.load %arg7[%c0_55, %c0_56] : memref<1x32xf32, #tpu.memory_space<vmem>>, vector<1x32xf32>
    %60 = vector.broadcast %59 : vector<1x32xf32> to vector<40x32xf32>
    %61 = arith.addf %58, %60 : vector<40x32xf32>
    %cst_57 = arith.constant 0.000000e+00 : f32
    %62 = vector.broadcast %cst_57 : f32 to vector<40x32xf32>
    %63 = arith.maximumf %61, %62 : vector<40x32xf32>
    %c8_58 = arith.constant 8 : index
    %c0_59 = arith.constant 0 : index
    %64 = vector.load %arg15[%c8_58, %c0_59] : memref<48x32xf32, #tpu.memory_space<vmem>>, vector<40x32xf32>
    %65 = arith.addf %63, %64 : vector<40x32xf32>
    %cst_60 = arith.constant 0.000000e+00 : f32
    %66 = vector.broadcast %cst_60 : f32 to vector<40x32xf32>
    %67 = arith.maximumf %65, %66 : vector<40x32xf32>
    %68 = vector.extract_strided_slice %67 {offsets = [0, 0], sizes = [16, 32], strides = [1, 1]} : vector<40x32xf32> to vector<16x32xf32>
    %c8_61 = arith.constant 8 : index
    %c0_62 = arith.constant 0 : index
    %69 = vector.load %arg15[%c8_61, %c0_62] : memref<48x32xf32, #tpu.memory_space<vmem>>, vector<16x32xf32>
    tpu.vector_store %arg15[%c8_61, %c0_62], %68 {strides = array<i32>} : memref<48x32xf32, #tpu.memory_space<vmem>>, vector<16x32xf32>,
    %70 = vector.extract_strided_slice %67 {offsets = [24, 0], sizes = [16, 32], strides = [1, 1]} : vector<40x32xf32> to vector<16x32xf32>
    %c32_63 = arith.constant 32 : index
    %c0_64 = arith.constant 0 : index
    %71 = vector.load %arg15[%c32_63, %c0_64] : memref<48x32xf32, #tpu.memory_space<vmem>>, vector<16x32xf32>
    tpu.vector_store %arg15[%c32_63, %c0_64], %70 {strides = array<i32>} : memref<48x32xf32, #tpu.memory_space<vmem>>, vector<16x32xf32>,
    %c4 = arith.constant 4 : index
    %c0_65 = arith.constant 0 : index
    %72 = vector.load %arg15[%c4, %c0_65] : memref<48x32xf32, #tpu.memory_space<vmem>>, vector<40x32xf32>
    %73 = arith.truncf %72 : vector<40x32xf32> to vector<40x32xbf16>
    %c0_66 = arith.constant 0 : index
    %c0_67 = arith.constant 0 : index
    %74 = vector.load %arg8[%c0_66, %c0_67] : memref<96x32xbf16, #tpu.memory_space<vmem>>, vector<32x32xbf16>
    %cst_68 = arith.constant dense<0.000000e+00> : vector<40x32xf32>
    %75 = tpu.matmul %73, %74, %cst_68 {dimension_numbers = #tpu.dot_dimension_numbers<[1], [0], [0], [1], [0, 0, 1, 1], [], []>} : vector<40x32xbf16>, vector<32x32xbf16>, vector<40x32xf32> -> vector<40x32xf32>
    %c6_69 = arith.constant 6 : index
    %c0_70 = arith.constant 0 : index
    %76 = vector.load %arg15[%c6_69, %c0_70] : memref<48x32xf32, #tpu.memory_space<vmem>>, vector<40x32xf32>
    %77 = arith.truncf %76 : vector<40x32xf32> to vector<40x32xbf16>
    %c32_71 = arith.constant 32 : index
    %c0_72 = arith.constant 0 : index
    %78 = vector.load %arg8[%c32_71, %c0_72] : memref<96x32xbf16, #tpu.memory_space<vmem>>, vector<32x32xbf16>
    %cst_73 = arith.constant dense<0.000000e+00> : vector<40x32xf32>
    %79 = tpu.matmul %77, %78, %cst_73 {dimension_numbers = #tpu.dot_dimension_numbers<[1], [0], [0], [1], [0, 0, 1, 1], [], []>} : vector<40x32xbf16>, vector<32x32xbf16>, vector<40x32xf32> -> vector<40x32xf32>
    %80 = arith.addf %75, %79 : vector<40x32xf32>
    %c8_74 = arith.constant 8 : index
    %c0_75 = arith.constant 0 : index
    %81 = vector.load %arg15[%c8_74, %c0_75] : memref<48x32xf32, #tpu.memory_space<vmem>>, vector<40x32xf32>
    %82 = arith.truncf %81 : vector<40x32xf32> to vector<40x32xbf16>
    %c64_76 = arith.constant 64 : index
    %c0_77 = arith.constant 0 : index
    %83 = vector.load %arg8[%c64_76, %c0_77] : memref<96x32xbf16, #tpu.memory_space<vmem>>, vector<32x32xbf16>
    %cst_78 = arith.constant dense<0.000000e+00> : vector<40x32xf32>
    %84 = tpu.matmul %82, %83, %cst_78 {dimension_numbers = #tpu.dot_dimension_numbers<[1], [0], [0], [1], [0, 0, 1, 1], [], []>} : vector<40x32xbf16>, vector<32x32xbf16>, vector<40x32xf32> -> vector<40x32xf32>
    %85 = arith.addf %80, %84 : vector<40x32xf32>
    %c0_79 = arith.constant 0 : index
    %c0_80 = arith.constant 0 : index
    %86 = vector.load %arg9[%c0_79, %c0_80] : memref<1x32xf32, #tpu.memory_space<vmem>>, vector<1x32xf32>
    %87 = vector.broadcast %86 : vector<1x32xf32> to vector<40x32xf32>
    %88 = arith.addf %85, %87 : vector<40x32xf32>
    %cst_81 = arith.constant 0.000000e+00 : f32
    %89 = vector.broadcast %cst_81 : f32 to vector<40x32xf32>
    %90 = arith.maximumf %88, %89 : vector<40x32xf32>
    %91 = vector.extract_strided_slice %90 {offsets = [0, 0], sizes = [16, 32], strides = [1, 1]} : vector<40x32xf32> to vector<16x32xf32>
    %c8_82 = arith.constant 8 : index
    %c0_83 = arith.constant 0 : index
    %92 = vector.load %arg16[%c8_82, %c0_83] : memref<48x32xf32, #tpu.memory_space<vmem>>, vector<16x32xf32>
    tpu.vector_store %arg16[%c8_82, %c0_83], %91 {strides = array<i32>} : memref<48x32xf32, #tpu.memory_space<vmem>>, vector<16x32xf32>,
    %93 = vector.extract_strided_slice %90 {offsets = [24, 0], sizes = [16, 32], strides = [1, 1]} : vector<40x32xf32> to vector<16x32xf32>
    %c32_84 = arith.constant 32 : index
    %c0_85 = arith.constant 0 : index
    %94 = vector.load %arg16[%c32_84, %c0_85] : memref<48x32xf32, #tpu.memory_space<vmem>>, vector<16x32xf32>
    tpu.vector_store %arg16[%c32_84, %c0_85], %93 {strides = array<i32>} : memref<48x32xf32, #tpu.memory_space<vmem>>, vector<16x32xf32>,
    %c4_86 = arith.constant 4 : index
    %c0_87 = arith.constant 0 : index
    %95 = vector.load %arg16[%c4_86, %c0_87] : memref<48x32xf32, #tpu.memory_space<vmem>>, vector<40x32xf32>
    %96 = arith.truncf %95 : vector<40x32xf32> to vector<40x32xbf16>
    %c0_88 = arith.constant 0 : index
    %c0_89 = arith.constant 0 : index
    %97 = vector.load %arg10[%c0_88, %c0_89] : memref<96x32xbf16, #tpu.memory_space<vmem>>, vector<32x32xbf16>
    %cst_90 = arith.constant dense<0.000000e+00> : vector<40x32xf32>
    %98 = tpu.matmul %96, %97, %cst_90 {dimension_numbers = #tpu.dot_dimension_numbers<[1], [0], [0], [1], [0, 0, 1, 1], [], []>} : vector<40x32xbf16>, vector<32x32xbf16>, vector<40x32xf32> -> vector<40x32xf32>
    %c6_91 = arith.constant 6 : index
    %c0_92 = arith.constant 0 : index
    %99 = vector.load %arg16[%c6_91, %c0_92] : memref<48x32xf32, #tpu.memory_space<vmem>>, vector<40x32xf32>
    %100 = arith.truncf %99 : vector<40x32xf32> to vector<40x32xbf16>
    %c32_93 = arith.constant 32 : index
    %c0_94 = arith.constant 0 : index
    %101 = vector.load %arg10[%c32_93, %c0_94] : memref<96x32xbf16, #tpu.memory_space<vmem>>, vector<32x32xbf16>
    %cst_95 = arith.constant dense<0.000000e+00> : vector<40x32xf32>
    %102 = tpu.matmul %100, %101, %cst_95 {dimension_numbers = #tpu.dot_dimension_numbers<[1], [0], [0], [1], [0, 0, 1, 1], [], []>} : vector<40x32xbf16>, vector<32x32xbf16>, vector<40x32xf32> -> vector<40x32xf32>
    %103 = arith.addf %98, %102 : vector<40x32xf32>
    %c8_96 = arith.constant 8 : index
    %c0_97 = arith.constant 0 : index
    %104 = vector.load %arg16[%c8_96, %c0_97] : memref<48x32xf32, #tpu.memory_space<vmem>>, vector<40x32xf32>
    %105 = arith.truncf %104 : vector<40x32xf32> to vector<40x32xbf16>
    %c64_98 = arith.constant 64 : index
    %c0_99 = arith.constant 0 : index
    %106 = vector.load %arg10[%c64_98, %c0_99] : memref<96x32xbf16, #tpu.memory_space<vmem>>, vector<32x32xbf16>
    %cst_100 = arith.constant dense<0.000000e+00> : vector<40x32xf32>
    %107 = tpu.matmul %105, %106, %cst_100 {dimension_numbers = #tpu.dot_dimension_numbers<[1], [0], [0], [1], [0, 0, 1, 1], [], []>} : vector<40x32xbf16>, vector<32x32xbf16>, vector<40x32xf32> -> vector<40x32xf32>
    %108 = arith.addf %103, %107 : vector<40x32xf32>
    %c0_101 = arith.constant 0 : index
    %c0_102 = arith.constant 0 : index
    %109 = vector.load %arg11[%c0_101, %c0_102] : memref<1x32xf32, #tpu.memory_space<vmem>>, vector<1x32xf32>
    %110 = vector.broadcast %109 : vector<1x32xf32> to vector<40x32xf32>
    %111 = arith.addf %108, %110 : vector<40x32xf32>
    %cst_103 = arith.constant 0.000000e+00 : f32
    %112 = vector.broadcast %cst_103 : f32 to vector<40x32xf32>
    %113 = arith.maximumf %111, %112 : vector<40x32xf32>
    %c8_104 = arith.constant 8 : index
    %c0_105 = arith.constant 0 : index
    %114 = vector.load %arg15[%c8_104, %c0_105] : memref<48x32xf32, #tpu.memory_space<vmem>>, vector<40x32xf32>
    %115 = arith.addf %113, %114 : vector<40x32xf32>
    %cst_106 = arith.constant 0.000000e+00 : f32
    %116 = vector.broadcast %cst_106 : f32 to vector<40x32xf32>
    %117 = arith.maximumf %115, %116 : vector<40x32xf32>
    %118 = vector.extract_strided_slice %117 {offsets = [0, 0], sizes = [16, 32], strides = [1, 1]} : vector<40x32xf32> to vector<16x32xf32>
    %c8_107 = arith.constant 8 : index
    %c0_108 = arith.constant 0 : index
    %119 = vector.load %arg15[%c8_107, %c0_108] : memref<48x32xf32, #tpu.memory_space<vmem>>, vector<16x32xf32>
    tpu.vector_store %arg15[%c8_107, %c0_108], %118 {strides = array<i32>} : memref<48x32xf32, #tpu.memory_space<vmem>>, vector<16x32xf32>,
    %120 = vector.extract_strided_slice %117 {offsets = [24, 0], sizes = [16, 32], strides = [1, 1]} : vector<40x32xf32> to vector<16x32xf32>
    %c32_109 = arith.constant 32 : index
    %c0_110 = arith.constant 0 : index
    %121 = vector.load %arg15[%c32_109, %c0_110] : memref<48x32xf32, #tpu.memory_space<vmem>>, vector<16x32xf32>
    tpu.vector_store %arg15[%c32_109, %c0_110], %120 {strides = array<i32>} : memref<48x32xf32, #tpu.memory_space<vmem>>, vector<16x32xf32>,
    %c0_111 = arith.constant 0 : index
    %c0_112 = arith.constant 0 : index
    %122 = vector.load %arg13[%c0_111, %c0_112] : memref<1x4xf32, #tpu.memory_space<vmem>>, vector<1x4xf32>
    %c16 = arith.constant 16 : index
    %c0_113 = arith.constant 0 : index
    %123 = vector.load %arg15[%c16, %c0_113] : memref<48x32xf32, #tpu.memory_space<vmem>>, vector<8x32xf32>
    %124 = arith.truncf %123 : vector<8x32xf32> to vector<8x32xbf16>
    %c0_114 = arith.constant 0 : index
    %c0_115 = arith.constant 0 : index
    %125 = vector.load %arg12[%c0_114, %c0_115] : memref<32x4xbf16, #tpu.memory_space<vmem>>, vector<32x4xbf16>
    %cst_116 = arith.constant dense<0.000000e+00> : vector<8x4xf32>
    %126 = tpu.matmul %124, %125, %cst_116 {dimension_numbers = #tpu.dot_dimension_numbers<[1], [0], [0], [1], [0, 0, 1, 1], [], []>} : vector<8x32xbf16>, vector<32x4xbf16>, vector<8x4xf32> -> vector<8x4xf32>
    %127 = vector.broadcast %122 : vector<1x4xf32> to vector<8x4xf32>
    %128 = arith.addf %126, %127 : vector<8x4xf32>
    %c0_117 = arith.constant 0 : index
    %c0_118 = arith.constant 0 : index
    %c0_119 = arith.constant 0 : index
    %129 = vector.load %arg14[%c0_117, %c0_118, %c0_119] : memref<2x8x4xf32, #tpu.memory_space<vmem>>, vector<1x8x4xf32>
    %130 = vector.shape_cast %129 : vector<1x8x4xf32> to vector<8x4xf32>
    %131 = vector.shape_cast %128 : vector<8x4xf32> to vector<1x8x4xf32>
    tpu.vector_store %arg14[%c0_117, %c0_118, %c0_119], %131 {strides = array<i32>} : memref<2x8x4xf32, #tpu.memory_space<vmem>>, vector<1x8x4xf32>,
    %c40 = arith.constant 40 : index
    %c0_120 = arith.constant 0 : index
    %132 = vector.load %arg15[%c40, %c0_120] : memref<48x32xf32, #tpu.memory_space<vmem>>, vector<8x32xf32>
    %133 = arith.truncf %132 : vector<8x32xf32> to vector<8x32xbf16>
    %c0_121 = arith.constant 0 : index
    %c0_122 = arith.constant 0 : index
    %134 = vector.load %arg12[%c0_121, %c0_122] : memref<32x4xbf16, #tpu.memory_space<vmem>>, vector<32x4xbf16>
    %cst_123 = arith.constant dense<0.000000e+00> : vector<8x4xf32>
    %135 = tpu.matmul %133, %134, %cst_123 {dimension_numbers = #tpu.dot_dimension_numbers<[1], [0], [0], [1], [0, 0, 1, 1], [], []>} : vector<8x32xbf16>, vector<32x4xbf16>, vector<8x4xf32> -> vector<8x4xf32>
    %136 = vector.broadcast %122 : vector<1x4xf32> to vector<8x4xf32>
    %137 = arith.addf %135, %136 : vector<8x4xf32>
    %c1_124 = arith.constant 1 : index
    %c0_125 = arith.constant 0 : index
    %c0_126 = arith.constant 0 : index
    %138 = vector.load %arg14[%c1_124, %c0_125, %c0_126] : memref<2x8x4xf32, #tpu.memory_space<vmem>>, vector<1x8x4xf32>
    %139 = vector.shape_cast %138 : vector<1x8x4xf32> to vector<8x4xf32>
    %140 = vector.shape_cast %137 : vector<8x4xf32> to vector<1x8x4xf32>
    tpu.vector_store %arg14[%c1_124, %c0_125, %c0_126], %140 {strides = array<i32>} : memref<2x8x4xf32, #tpu.memory_space<vmem>>, vector<1x8x4xf32>,
    return
  }
  func.func @transform_0(%arg0: i32) -> (i32, i32, i32) {
    %c0_i32 = arith.constant 0 : i32
    %c0_i32_0 = arith.constant 0 : i32
    %c0_i32_1 = arith.constant 0 : i32
    return %arg0, %c0_i32, %c0_i32_0 : i32, i32, i32
  }
  func.func @transform_1(%arg0: i32) -> (i32, i32) {
    %c0_i32 = arith.constant 0 : i32
    %c0_i32_0 = arith.constant 0 : i32
    %c0_i32_1 = arith.constant 0 : i32
    return %c0_i32, %c0_i32_0 : i32, i32
  }
  func.func @transform_2(%arg0: i32) -> (i32, i32) {
    %c0_i32 = arith.constant 0 : i32
    %c0_i32_0 = arith.constant 0 : i32
    %c0_i32_1 = arith.constant 0 : i32
    return %c0_i32, %c0_i32_0 : i32, i32
  }
  func.func @transform_3(%arg0: i32) -> (i32, i32) {
    %c0_i32 = arith.constant 0 : i32
    %c0_i32_0 = arith.constant 0 : i32
    %c0_i32_1 = arith.constant 0 : i32
    return %c0_i32, %c0_i32_0 : i32, i32
  }
  func.func @transform_4(%arg0: i32) -> (i32, i32) {
    %c0_i32 = arith.constant 0 : i32
    %c0_i32_0 = arith.constant 0 : i32
    %c0_i32_1 = arith.constant 0 : i32
    return %c0_i32, %c0_i32_0 : i32, i32
  }
  func.func @transform_5(%arg0: i32) -> (i32, i32) {
    %c0_i32 = arith.constant 0 : i32
    %c0_i32_0 = arith.constant 0 : i32
    %c0_i32_1 = arith.constant 0 : i32
    return %c0_i32, %c0_i32_0 : i32, i32
  }
  func.func @transform_6(%arg0: i32) -> (i32, i32) {
    %c0_i32 = arith.constant 0 : i32
    %c0_i32_0 = arith.constant 0 : i32
    %c0_i32_1 = arith.constant 0 : i32
    return %c0_i32, %c0_i32_0 : i32, i32
  }
  func.func @transform_7(%arg0: i32) -> (i32, i32) {
    %c0_i32 = arith.constant 0 : i32
    %c0_i32_0 = arith.constant 0 : i32
    %c0_i32_1 = arith.constant 0 : i32
    return %c0_i32, %c0_i32_0 : i32, i32
  }
  func.func @transform_8(%arg0: i32) -> (i32, i32) {
    %c0_i32 = arith.constant 0 : i32
    %c0_i32_0 = arith.constant 0 : i32
    %c0_i32_1 = arith.constant 0 : i32
    return %c0_i32, %c0_i32_0 : i32, i32
  }
  func.func @transform_9(%arg0: i32) -> (i32, i32) {
    %c0_i32 = arith.constant 0 : i32
    %c0_i32_0 = arith.constant 0 : i32
    %c0_i32_1 = arith.constant 0 : i32
    return %c0_i32, %c0_i32_0 : i32, i32
  }
  func.func @transform_10(%arg0: i32) -> (i32, i32) {
    %c0_i32 = arith.constant 0 : i32
    %c0_i32_0 = arith.constant 0 : i32
    %c0_i32_1 = arith.constant 0 : i32
    return %c0_i32, %c0_i32_0 : i32, i32
  }
  func.func @transform_11(%arg0: i32) -> (i32, i32) {
    %c0_i32 = arith.constant 0 : i32
    %c0_i32_0 = arith.constant 0 : i32
    %c0_i32_1 = arith.constant 0 : i32
    return %c0_i32, %c0_i32_0 : i32, i32
  }
  func.func @transform_12(%arg0: i32) -> (i32, i32) {
    %c0_i32 = arith.constant 0 : i32
    %c0_i32_0 = arith.constant 0 : i32
    %c0_i32_1 = arith.constant 0 : i32
    return %c0_i32, %c0_i32_0 : i32, i32
  }
  func.func @transform_13(%arg0: i32) -> (i32, i32, i32) {
    %c0_i32 = arith.constant 0 : i32
    %c0_i32_0 = arith.constant 0 : i32
    %c0_i32_1 = arith.constant 0 : i32
    return %arg0, %c0_i32, %c0_i32_0 : i32, i32, i32
  }
}

</mosaic_0001>

<llo_original>
// kernel: tpu_custom_call.1
$region0: #{tpu_custom_call.1}
  #allocation0 [shape = 'u32[]', space=smem, size = 0x4, offset = 0x4, fixed_abs, tag = 'smem constant byte address 0x4 - core index']
  #allocation1 [shape = 'u32[72,128]{1,0:T(1,128)}', space=vmem, size = 0x9000, scoped, tag = 'internal scratch']
  #allocation2 [shape = 'f32[48,32]{1,0:T(8,128)}', space=vmem, size = 0x6000, scoped, tag = 'scratch operand']
  #allocation3 [shape = 'f32[48,32]{1,0:T(8,128)}', space=vmem, size = 0x6000, scoped, tag = 'scratch operand']
  %s0 = inlined_call_operand.vmem [shape: f32[4,16,4], index: 0, kind: input, shape index: {}]
  %s1 = inlined_call_operand.vmem [shape: bf16[4,32], index: 1, kind: input, shape index: {}]
  %s2 = inlined_call_operand.vmem [shape: f32[1,32], index: 2, kind: input, shape index: {}]
  %s3 = inlined_call_operand.vmem [shape: bf16[96,32], index: 3, kind: input, shape index: {}]
  %s4 = inlined_call_operand.vmem [shape: f32[1,32], index: 4, kind: input, shape index: {}]
  %s5 = inlined_call_operand.vmem [shape: bf16[96,32], index: 5, kind: input, shape index: {}]
  %s6 = inlined_call_operand.vmem [shape: f32[1,32], index: 6, kind: input, shape index: {}]
  %s7 = inlined_call_operand.vmem [shape: bf16[96,32], index: 7, kind: input, shape index: {}]
  %s8 = inlined_call_operand.vmem [shape: f32[1,32], index: 8, kind: input, shape index: {}]
  %s9 = inlined_call_operand.vmem [shape: bf16[96,32], index: 9, kind: input, shape index: {}]
  %s10 = inlined_call_operand.vmem [shape: f32[1,32], index: 10, kind: input, shape index: {}]
  %s11 = inlined_call_operand.vmem [shape: bf16[32,4], index: 11, kind: input, shape index: {}]
  %s12 = inlined_call_operand.vmem [shape: f32[1,4], index: 12, kind: input, shape index: {}]
  %s13 = inlined_call_operand.vmem [shape: f32[4,8,4], index: 13, kind: output, shape index: {}]
  %s14 = sld [smem:[#allocation0]]
  $region85: #{tpu_custom_call.1} parent=0
    _
  %s16 = ssub.s32 1, %s14
  %s17 = scalar_select 0, %s16, %s14
  loop: start=0, step=1, limit=4
  $region2: #{tpu_custom_call.1} parent=0 // loop_pre_header
    _
  $region3: #{tpu_custom_call.1} parent=0 // loop_header
    %s19 = sphi 0, %s23
    %p20 = scmp.ge.s32.totalorder %s19, 4
    %s29 = sphi 0, %s31
    %s32 = sphi 0, %s29
    %s33 = sphi 0, %s32
    %s49 = sphi 0, %s33
    %s53 = sphi 0, %s53
    %s55 = sphi 0, %s53
    %s56 = sphi 0, %s55
    %s70 = sphi 0, %s56
    %s74 = sphi 0, %s74
    %s76 = sphi 0, %s74
    %s77 = sphi 0, %s76
    %s91 = sphi 0, %s77
    %s95 = sphi 0, %s95
    %s97 = sphi 0, %s95
    %s98 = sphi 0, %s97
    %s112 = sphi 0, %s98
    %s116 = sphi 0, %s116
    %s118 = sphi 0, %s116
    %s119 = sphi 0, %s118
    %s133 = sphi 0, %s119
    %s137 = sphi 0, %s137
    %s139 = sphi 0, %s137
    %s140 = sphi 0, %s139
    %s154 = sphi 0, %s140
    %s158 = sphi 0, %s158
    %s160 = sphi 0, %s158
    %s161 = sphi 0, %s160
    %s175 = sphi 0, %s161
    %s179 = sphi 0, %s179
    %s181 = sphi 0, %s179
    %s182 = sphi 0, %s181
    %s196 = sphi 0, %s182
    %s200 = sphi 0, %s200
    %s202 = sphi 0, %s200
    %s203 = sphi 0, %s202
    %s217 = sphi 0, %s203
    %s221 = sphi 0, %s221
    %s223 = sphi 0, %s221
    %s224 = sphi 0, %s223
    %s238 = sphi 0, %s224
    %s242 = sphi 0, %s242
    %s244 = sphi 0, %s242
    %s245 = sphi 0, %s244
    %s259 = sphi 0, %s245
    %s263 = sphi 0, %s263
    %s265 = sphi 0, %s263
    %s266 = sphi 0, %s265
    %s280 = sphi 0, %s266
    %s284 = sphi 0, %s284
    %s286 = sphi 0, %s284
    %s287 = sphi 0, %s286
    %s301 = sphi 0, %s287
    %s307 = sphi 0, %s309
    %s310 = sphi 0, %s307
    %s311 = sphi 0, %s310
    %s327 = sphi 0, %s311
  $region4: #{tpu_custom_call.1} parent=0 // loop_header_branch
    %22 = sbr.rel (%p20) target = $region8
  $region5: #{tpu_custom_call.1} parent=0 // loop_body
    %s24 = ssub.s32 %s19, 1
    %s25 = ssub.s32 %s19, 2
    %s26 = sadd.s32 %s19, 1
    %s27 = ssub.s32 %s19, %s26
    %p28 = scmp.eq.s32.totalorder %s27, 0
    %s30 = sadd.s32 %s29, 1
    %s31 = scalar_select %p28, %s29, %s30
    %p34 = pneg %p28
    %p35 = scmp.eq.s32.totalorder %s19, 1
    %p36 = por %p34, %p35
    %p37 = scmp.ne.s32.totalorder %s29, %s32
    %p38 = scmp.eq.s32.totalorder %s19, 0
    %p39 = por %p37, %p38
    %p40 = scmp.ne.s32.totalorder %s29, %s32
    %p41 = scmp.eq.s32.totalorder %s24, 1
    %p42 = por %p40, %p41
    %p43 = scmp.ne.s32.totalorder %s32, %s33
    %p44 = scmp.eq.s32.totalorder %s24, 0
    %p45 = por %p43, %p44
    %p46 = scmp.ne.s32.totalorder %s32, %s33
    %p47 = scmp.eq.s32.totalorder %s25, 1
    %p48 = por %p46, %p47
    %p50 = scmp.ne.s32.totalorder %s33, %s49
    %p51 = scmp.eq.s32.totalorder %s25, 0
    %p52 = por %p50, %p51
    %s54 = sadd.s32 %s53, 1
    %p57 = scmp.eq.s32.totalorder %s19, 1
    %p58 = scmp.ne.s32.totalorder %s53, %s55
    %p59 = scmp.eq.s32.totalorder %s19, 0
    %p60 = por %p58, %p59
    %p61 = scmp.ne.s32.totalorder %s53, %s55
    %p62 = scmp.eq.s32.totalorder %s24, 1
    %p63 = por %p61, %p62
    %p64 = scmp.ne.s32.totalorder %s55, %s56
    %p65 = scmp.eq.s32.totalorder %s24, 0
    %p66 = por %p64, %p65
    %p67 = scmp.ne.s32.totalorder %s55, %s56
    %p68 = scmp.eq.s32.totalorder %s25, 1
    %p69 = por %p67, %p68
    %p71 = scmp.ne.s32.totalorder %s56, %s70
    %p72 = scmp.eq.s32.totalorder %s25, 0
    %p73 = por %p71, %p72
    %s75 = sadd.s32 %s74, 1
    %p78 = scmp.eq.s32.totalorder %s19, 1
    %p79 = scmp.ne.s32.totalorder %s74, %s76
    %p80 = scmp.eq.s32.totalorder %s19, 0
    %p81 = por %p79, %p80
    %p82 = scmp.ne.s32.totalorder %s74, %s76
    %p83 = scmp.eq.s32.totalorder %s24, 1
    %p84 = por %p82, %p83
    %p85 = scmp.ne.s32.totalorder %s76, %s77
    %p86 = scmp.eq.s32.totalorder %s24, 0
    %p87 = por %p85, %p86
    %p88 = scmp.ne.s32.totalorder %s76, %s77
    %p89 = scmp.eq.s32.totalorder %s25, 1
    %p90 = por %p88, %p89
    %p92 = scmp.ne.s32.totalorder %s77, %s91
    %p93 = scmp.eq.s32.totalorder %s25, 0
    %p94 = por %p92, %p93
    %s96 = sadd.s32 %s95, 1
    %p99 = scmp.eq.s32.totalorder %s19, 1
    %p100 = scmp.ne.s32.totalorder %s95, %s97
    %p101 = scmp.eq.s32.totalorder %s19, 0
    %p102 = por %p100, %p101
    %p103 = scmp.ne.s32.totalorder %s95, %s97
    %p104 = scmp.eq.s32.totalorder %s24, 1
    %p105 = por %p103, %p104
    %p106 = scmp.ne.s32.totalorder %s97, %s98
    %p107 = scmp.eq.s32.totalorder %s24, 0
    %p108 = por %p106, %p107
    %p109 = scmp.ne.s32.totalorder %s97, %s98
    %p110 = scmp.eq.s32.totalorder %s25, 1
    %p111 = por %p109, %p110
    %p113 = scmp.ne.s32.totalorder %s98, %s112
    %p114 = scmp.eq.s32.totalorder %s25, 0
    %p115 = por %p113, %p114
    %s117 = sadd.s32 %s116, 1
    %p120 = scmp.eq.s32.totalorder %s19, 1
    %p121 = scmp.ne.s32.totalorder %s116, %s118
    %p122 = scmp.eq.s32.totalorder %s19, 0
    %p123 = por %p121, %p122
    %p124 = scmp.ne.s32.totalorder %s116, %s118
    %p125 = scmp.eq.s32.totalorder %s24, 1
    %p126 = por %p124, %p125
    %p127 = scmp.ne.s32.totalorder %s118, %s119
    %p128 = scmp.eq.s32.totalorder %s24, 0
    %p129 = por %p127, %p128
    %p130 = scmp.ne.s32.totalorder %s118, %s119
    %p131 = scmp.eq.s32.totalorder %s25, 1
    %p132 = por %p130, %p131
    %p134 = scmp.ne.s32.totalorder %s119, %s133
    %p135 = scmp.eq.s32.totalorder %s25, 0
    %p136 = por %p134, %p135
    %s138 = sadd.s32 %s137, 1
    %p141 = scmp.eq.s32.totalorder %s19, 1
    %p142 = scmp.ne.s32.totalorder %s137, %s139
    %p143 = scmp.eq.s32.totalorder %s19, 0
    %p144 = por %p142, %p143
    %p145 = scmp.ne.s32.totalorder %s137, %s139
    %p146 = scmp.eq.s32.totalorder %s24, 1
    %p147 = por %p145, %p146
    %p148 = scmp.ne.s32.totalorder %s139, %s140
    %p149 = scmp.eq.s32.totalorder %s24, 0
    %p150 = por %p148, %p149
    %p151 = scmp.ne.s32.totalorder %s139, %s140
    %p152 = scmp.eq.s32.totalorder %s25, 1
    %p153 = por %p151, %p152
    %p155 = scmp.ne.s32.totalorder %s140, %s154
    %p156 = scmp.eq.s32.totalorder %s25, 0
    %p157 = por %p155, %p156
    %s159 = sadd.s32 %s158, 1
    %p162 = scmp.eq.s32.totalorder %s19, 1
    %p163 = scmp.ne.s32.totalorder %s158, %s160
    %p164 = scmp.eq.s32.totalorder %s19, 0
    %p165 = por %p163, %p164
    %p166 = scmp.ne.s32.totalorder %s158, %s160
    %p167 = scmp.eq.s32.totalorder %s24, 1
    %p168 = por %p166, %p167
    %p169 = scmp.ne.s32.totalorder %s160, %s161
    %p170 = scmp.eq.s32.totalorder %s24, 0
    %p171 = por %p169, %p170
    %p172 = scmp.ne.s32.totalorder %s160, %s161
    %p173 = scmp.eq.s32.totalorder %s25, 1
    %p174 = por %p172, %p173
    %p176 = scmp.ne.s32.totalorder %s161, %s175
    %p177 = scmp.eq.s32.totalorder %s25, 0
    %p178 = por %p176, %p177
    %s180 = sadd.s32 %s179, 1
    %p183 = scmp.eq.s32.totalorder %s19, 1
    %p184 = scmp.ne.s32.totalorder %s179, %s181
    %p185 = scmp.eq.s32.totalorder %s19, 0
    %p186 = por %p184, %p185
    %p187 = scmp.ne.s32.totalorder %s179, %s181
    %p188 = scmp.eq.s32.totalorder %s24, 1
    %p189 = por %p187, %p188
    %p190 = scmp.ne.s32.totalorder %s181, %s182
    %p191 = scmp.eq.s32.totalorder %s24, 0
    %p192 = por %p190, %p191
    %p193 = scmp.ne.s32.totalorder %s181, %s182
    %p194 = scmp.eq.s32.totalorder %s25, 1
    %p195 = por %p193, %p194
    %p197 = scmp.ne.s32.totalorder %s182, %s196
    %p198 = scmp.eq.s32.totalorder %s25, 0
    %p199 = por %p197, %p198
    %s201 = sadd.s32 %s200, 1
    %p204 = scmp.eq.s32.totalorder %s19, 1
    %p205 = scmp.ne.s32.totalorder %s200, %s202
    %p206 = scmp.eq.s32.totalorder %s19, 0
    %p207 = por %p205, %p206
    %p208 = scmp.ne.s32.totalorder %s200, %s202
    %p209 = scmp.eq.s32.totalorder %s24, 1
    %p210 = por %p208, %p209
    %p211 = scmp.ne.s32.totalorder %s202, %s203
    %p212 = scmp.eq.s32.totalorder %s24, 0
    %p213 = por %p211, %p212
    %p214 = scmp.ne.s32.totalorder %s202, %s203
    %p215 = scmp.eq.s32.totalorder %s25, 1
    %p216 = por %p214, %p215
    %p218 = scmp.ne.s32.totalorder %s203, %s217
    %p219 = scmp.eq.s32.totalorder %s25, 0
    %p220 = por %p218, %p219
    %s222 = sadd.s32 %s221, 1
    %p225 = scmp.eq.s32.totalorder %s19, 1
    %p226 = scmp.ne.s32.totalorder %s221, %s223
    %p227 = scmp.eq.s32.totalorder %s19, 0
    %p228 = por %p226, %p227
    %p229 = scmp.ne.s32.totalorder %s221, %s223
    %p230 = scmp.eq.s32.totalorder %s24, 1
    %p231 = por %p229, %p230
    %p232 = scmp.ne.s32.totalorder %s223, %s224
    %p233 = scmp.eq.s32.totalorder %s24, 0
    %p234 = por %p232, %p233
    %p235 = scmp.ne.s32.totalorder %s223, %s224
    %p236 = scmp.eq.s32.totalorder %s25, 1
    %p237 = por %p235, %p236
    %p239 = scmp.ne.s32.totalorder %s224, %s238
    %p240 = scmp.eq.s32.totalorder %s25, 0
    %p241 = por %p239, %p240
    %s243 = sadd.s32 %s242, 1
    %p246 = scmp.eq.s32.totalorder %s19, 1
    %p247 = scmp.ne.s32.totalorder %s242, %s244
    %p248 = scmp.eq.s32.totalorder %s19, 0
    %p249 = por %p247, %p248
    %p250 = scmp.ne.s32.totalorder %s242, %s244
    %p251 = scmp.eq.s32.totalorder %s24, 1
    %p252 = por %p250, %p251
    %p253 = scmp.ne.s32.totalorder %s244, %s245
    %p254 = scmp.eq.s32.totalorder %s24, 0
    %p255 = por %p253, %p254
    %p256 = scmp.ne.s32.totalorder %s244, %s245
    %p257 = scmp.eq.s32.totalorder %s25, 1
    %p258 = por %p256, %p257
    %p260 = scmp.ne.s32.totalorder %s245, %s259
    %p261 = scmp.eq.s32.totalorder %s25, 0
    %p262 = por %p260, %p261
    %s264 = sadd.s32 %s263, 1
    %p267 = scmp.eq.s32.totalorder %s19, 1
    %p268 = scmp.ne.s32.totalorder %s263, %s265
    %p269 = scmp.eq.s32.totalorder %s19, 0
    %p270 = por %p268, %p269
    %p271 = scmp.ne.s32.totalorder %s263, %s265
    %p272 = scmp.eq.s32.totalorder %s24, 1
    %p273 = por %p271, %p272
    %p274 = scmp.ne.s32.totalorder %s265, %s266
    %p275 = scmp.eq.s32.totalorder %s24, 0
    %p276 = por %p274, %p275
    %p277 = scmp.ne.s32.totalorder %s265, %s266
    %p278 = scmp.eq.s32.totalorder %s25, 1
    %p279 = por %p277, %p278
    %p281 = scmp.ne.s32.totalorder %s266, %s280
    %p282 = scmp.eq.s32.totalorder %s25, 0
    %p283 = por %p281, %p282
    %s285 = sadd.s32 %s284, 1
    %p288 = scmp.eq.s32.totalorder %s19, 1
    %p289 = scmp.ne.s32.totalorder %s284, %s286
    %p290 = scmp.eq.s32.totalorder %s19, 0
    %p291 = por %p289, %p290
    %p292 = scmp.ne.s32.totalorder %s284, %s286
    %p293 = scmp.eq.s32.totalorder %s24, 1
    %p294 = por %p292, %p293
    %p295 = scmp.ne.s32.totalorder %s286, %s287
    %p296 = scmp.eq.s32.totalorder %s24, 0
    %p297 = por %p295, %p296
    %p298 = scmp.ne.s32.totalorder %s286, %s287
    %p299 = scmp.eq.s32.totalorder %s25, 1
    %p300 = por %p298, %p299
    %p302 = scmp.ne.s32.totalorder %s287, %s301
    %p303 = scmp.eq.s32.totalorder %s25, 0
    %p304 = por %p302, %p303
    %s305 = ssub.s32 %s19, %s26
    %p306 = scmp.eq.s32.totalorder %s305, 0
    %s308 = sadd.s32 %s307, 1
    %s309 = scalar_select %p306, %s307, %s308
    %p312 = pneg %p306
    %p313 = scmp.eq.s32.totalorder %s19, 1
    %p314 = por %p312, %p313
    %p315 = scmp.ne.s32.totalorder %s307, %s310
    %p316 = scmp.eq.s32.totalorder %s19, 0
    %p317 = por %p315, %p316
    %p318 = scmp.ne.s32.totalorder %s307, %s310
    %p319 = scmp.eq.s32.totalorder %s24, 1
    %p320 = por %p318, %p319
    %p321 = scmp.ne.s32.totalorder %s310, %s311
    %p322 = scmp.eq.s32.totalorder %s24, 0
    %p323 = por %p321, %p322
    %p324 = scmp.ne.s32.totalorder %s310, %s311
    %p325 = scmp.eq.s32.totalorder %s25, 1
    %p326 = por %p324, %p325
    %p328 = scmp.ne.s32.totalorder %s311, %s327
    %p329 = scmp.eq.s32.totalorder %s25, 0
    %p330 = por %p328, %p329
    %p331 = scmp.le.s32.totalorder 1, %s19
    %p332 = scmp.lt.s32.totalorder %s19, 3
    %p333 = pnand %p331, %p332
    %p334 = pneg %p333
    // Predicated region
    $region9: #{tpu_custom_call.1} parent=5 // pred_check
      _
    $region10: #{tpu_custom_call.1} parent=5 // pred_check_branch
      %336 = sbr.rel (%p333) target = $region12
    $region11: #{tpu_custom_call.1} parent=5 // pred_region
      %s337 = ssub.s32 %s19, 1
      // Predicated region
      $region13: #{tpu_custom_call.1} parent=11 // pred_check
        %p338 = pneg %p66
      $region14: #{tpu_custom_call.1} parent=11 // pred_check_branch
        %340 = sbr.rel (%p338) target = $region16
      $region15: #{tpu_custom_call.1} parent=11 // pred_region
        _
      $region16: #{tpu_custom_call.1} parent=11 // pred_fallthru
        _
      // Predicated region
      $region17: #{tpu_custom_call.1} parent=11 // pred_check
        %p341 = pneg %p87
      $region18: #{tpu_custom_call.1} parent=11 // pred_check_branch
        %343 = sbr.rel (%p341) target = $region20
      $region19: #{tpu_custom_call.1} parent=11 // pred_region
        _
      $region20: #{tpu_custom_call.1} parent=11 // pred_fallthru
        _
      // Predicated region
      $region21: #{tpu_custom_call.1} parent=11 // pred_check
        %p344 = pneg %p108
      $region22: #{tpu_custom_call.1} parent=11 // pred_check_branch
        %346 = sbr.rel (%p344) target = $region24
      $region23: #{tpu_custom_call.1} parent=11 // pred_region
        _
      $region24: #{tpu_custom_call.1} parent=11 // pred_fallthru
        _
      // Predicated region
      $region25: #{tpu_custom_call.1} parent=11 // pred_check
        %p347 = pneg %p129
      $region26: #{tpu_custom_call.1} parent=11 // pred_check_branch
        %349 = sbr.rel (%p347) target = $region28
      $region27: #{tpu_custom_call.1} parent=11 // pred_region
        _
      $region28: #{tpu_custom_call.1} parent=11 // pred_fallthru
        _
      // Predicated region
      $region29: #{tpu_custom_call.1} parent=11 // pred_check
        %p350 = pneg %p150
      $region30: #{tpu_custom_call.1} parent=11 // pred_check_branch
        %352 = sbr.rel (%p350) target = $region32
      $region31: #{tpu_custom_call.1} parent=11 // pred_region
        _
      $region32: #{tpu_custom_call.1} parent=11 // pred_fallthru
        _
      // Predicated region
      $region33: #{tpu_custom_call.1} parent=11 // pred_check
        %p353 = pneg %p171
      $region34: #{tpu_custom_call.1} parent=11 // pred_check_branch
        %355 = sbr.rel (%p353) target = $region36
      $region35: #{tpu_custom_call.1} parent=11 // pred_region
        _
      $region36: #{tpu_custom_call.1} parent=11 // pred_fallthru
        _
      // Predicated region
      $region37: #{tpu_custom_call.1} parent=11 // pred_check
        %p356 = pneg %p192
      $region38: #{tpu_custom_call.1} parent=11 // pred_check_branch
        %358 = sbr.rel (%p356) target = $region40
      $region39: #{tpu_custom_call.1} parent=11 // pred_region
        _
      $region40: #{tpu_custom_call.1} parent=11 // pred_fallthru
        _
      // Predicated region
      $region41: #{tpu_custom_call.1} parent=11 // pred_check
        %p359 = pneg %p213
      $region42: #{tpu_custom_call.1} parent=11 // pred_check_branch
        %361 = sbr.rel (%p359) target = $region44
      $region43: #{tpu_custom_call.1} parent=11 // pred_region
        _
      $region44: #{tpu_custom_call.1} parent=11 // pred_fallthru
        _
      // Predicated region
      $region45: #{tpu_custom_call.1} parent=11 // pred_check
        %p362 = pneg %p234
      $region46: #{tpu_custom_call.1} parent=11 // pred_check_branch
        %364 = sbr.rel (%p362) target = $region48
      $region47: #{tpu_custom_call.1} parent=11 // pred_region
        _
      $region48: #{tpu_custom_call.1} parent=11 // pred_fallthru
        _
      // Predicated region
      $region49: #{tpu_custom_call.1} parent=11 // pred_check
        %p365 = pneg %p255
      $region50: #{tpu_custom_call.1} parent=11 // pred_check_branch
        %367 = sbr.rel (%p365) target = $region52
      $region51: #{tpu_custom_call.1} parent=11 // pred_region
        _
      $region52: #{tpu_custom_call.1} parent=11 // pred_fallthru
        _
      // Predicated region
      $region53: #{tpu_custom_call.1} parent=11 // pred_check
        %p368 = pneg %p276
      $region54: #{tpu_custom_call.1} parent=11 // pred_check_branch
        %370 = sbr.rel (%p368) target = $region56
      $region55: #{tpu_custom_call.1} parent=11 // pred_region
        _
      $region56: #{tpu_custom_call.1} parent=11 // pred_fallthru
        _
      // Predicated region
      $region57: #{tpu_custom_call.1} parent=11 // pred_check
        %p371 = pneg %p297
      $region58: #{tpu_custom_call.1} parent=11 // pred_check_branch
        %373 = sbr.rel (%p371) target = $region60
      $region59: #{tpu_custom_call.1} parent=11 // pred_region
        _
      $region60: #{tpu_custom_call.1} parent=11 // pred_fallthru
        _
    $region12: #{tpu_custom_call.1} parent=5 // pred_fallthru
      _
    %p374 = scmp.lt.s32.totalorder %s19, 2
    // Predicated region
    $region61: #{tpu_custom_call.1} parent=5 // pred_check
      %p375 = pneg %p374
    $region62: #{tpu_custom_call.1} parent=5 // pred_check_branch
      %377 = sbr.rel (%p375) target = $region64
    $region63: #{tpu_custom_call.1} parent=5 // pred_region
      // Predicated region
      $region65: #{tpu_custom_call.1} parent=63 // pred_check
        %p378 = pneg %p39
      $region66: #{tpu_custom_call.1} parent=63 // pred_check_branch
        %380 = sbr.rel (%p378) target = $region68
      $region67: #{tpu_custom_call.1} parent=63 // pred_region
        %s381 = smul.u32 2, %s19
        %p382 = scmp.lt.s32.totalorder %s381, 3
        %s383 = scalar_select %p382, %s381, 3
        %s384 = smul.addr %s383, 2
        %s385 = smul.addr %s384, 8
        %s386 = scalar_lea.vmem %s0, %s385
        %s387 = smul.u32 2, %s19
      $region68: #{tpu_custom_call.1} parent=63 // pred_fallthru
        _
    $region64: #{tpu_custom_call.1} parent=5 // pred_fallthru
      _
    %p388 = scmp.le.s32.totalorder 1, %s19
    %p389 = scmp.lt.s32.totalorder %s19, 3
    %p390 = pnand %p388, %p389
    %p391 = pneg %p390
    // Predicated region
    $region69: #{tpu_custom_call.1} parent=5 // pred_check
      _
    $region70: #{tpu_custom_call.1} parent=5 // pred_check_branch
      %393 = sbr.rel (%p390) target = $region72
    $region71: #{tpu_custom_call.1} parent=5 // pred_region
      %s394 = ssub.s32 %s19, 1
      %s395 = smul.u32 2, %s24
      %p396 = scmp.lt.s32.totalorder %s395, 3
      %s397 = scalar_select %p396, %s395, 3
      %s398 = smul.addr %s397, 2
      %s399 = smul.addr %s398, 8
      %s400 = scalar_lea.vmem %s0, %s399
      %p401 = pneg %p45
      %p402 = pneg %p42
      %p403 = pneg %p66
      %p404 = pneg %p63
      %p405 = pneg %p87
      %p406 = pneg %p84
      %p407 = pneg %p108
      %p408 = pneg %p105
      %p409 = pneg %p129
      %p410 = pneg %p126
      %p411 = pneg %p150
      %p412 = pneg %p147
      %p413 = pneg %p171
      %p414 = pneg %p168
      %p415 = pneg %p192
      %p416 = pneg %p189
      %p417 = pneg %p213
      %p418 = pneg %p210
      %p419 = pneg %p234
      %p420 = pneg %p231
      %p421 = pneg %p255
      %p422 = pneg %p252
      %p423 = pneg %p276
      %p424 = pneg %p273
      %p425 = pneg %p297
      %p426 = pneg %p294
      %p427 = pneg %p323
      %p428 = pneg %p320
      %s429 = smul.u32 2, %s24
      %p430 = scmp.lt.s32.totalorder %s429, 3
      %s431 = scalar_select %p430, %s429, 3
      %s432 = smul.addr %s431, 8
      %s433 = scalar_lea.vmem %s13, %s432
      %s434 = smul.u32 2, %s24
      %p435 = scmp.lt.s32.totalorder %s434, 3
      %s436 = scalar_select %p435, %s434, 3
      %s437 = smul.addr %s436, 2
      %s438 = smul.addr %s437, 8
      %s439 = scalar_lea.vmem %s0, %s438
      %s440 = smul.u32 2, %s24
      %s441 = smul.u32 2, %s24
      %p442 = scmp.lt.s32.totalorder %s441, 3
      %s443 = scalar_select %p442, %s441, 3
      %s444 = smul.addr %s443, 8
      %s445 = scalar_lea.vmem %s13, %s444
      %s446 = smul.u32 2, %s24
      %vm448 = vcmask 261120
      %449 = vst.msk [vmem:[#allocation2] sm:$0xff] %vm448, 0.0
      %450 = vst.msk [vmem:[#allocation3] sm:$0xff] %vm448, 0.0
      %451 = vst.msk [vmem:[#allocation2 + $0x18] sm:$0xff] %vm448, 0.0
      %452 = vst.msk [vmem:[#allocation3 + $0x18] sm:$0xff] %vm448, 0.0
      %v453 = vld [vmem:[%s2] sm:$0x1]
      %v454 = vld [vmem:[%s439] sm:$0xff]
      %v455 = vld [vmem:[%s439 + $0x8] sm:$0xff]
      %v456 = vpack.c.bf16 %v455, %v454
      %v457 = vld [vmem:[%s1] sm:$0x3]
      %v459 = vperm.slane %v453, 0
      %vm461 = vcmask 31744
      %v463 = vsel %vm461, %v456, 0
      %vm465 = vcmask 1041408
      %v467 = vsel %vm465, %v457, 0
      %469 = vmatpush.bf16.msra.mxu0 0
      %470 = vmatpush.bf16.msra.mxu0 0
      %471 = vmatpush.bf16.msra.mxu0 0
      %472 = vmatpush.bf16.msra.mxu0 0
      %473 = vmatpush.bf16.msra.mxu0 0
      %474 = vmatpush.bf16.msra.mxu0 0
      %475 = vmatpush.bf16.msra.mxu0 0
      %476 = vmatpush.bf16.msra.mxu0 %v467
      %477 = vmatmul.bf16.gmra.mxu0 %v463
      %v478 = vpop.f32.mrf.mxu0
      %v479 = vadd.f32 %v459, %v478
      %v480 = vpop.f32.mrf.mxu0
      %v481 = vadd.f32 %v459, %v480
      %482 = vdwg.mxu0
      %483 = vst.msk [vmem:[#allocation2 + $0x8] sm:$0xff] %vm448, %v479
      %484 = vst.msk [vmem:[#allocation2 + $0x10] sm:$0xff] %vm448, %v481
      %s485 = scalar_lea.vmem %s439, 16
      %v486 = vld [vmem:[%s485] sm:$0xff]
      %v487 = vld [vmem:[%s485 + $0x8] sm:$0xff]
      %v488 = vpack.c.bf16 %v487, %v486
      %v489 = vld [vmem:[%s1] sm:$0x3]
      %v491 = vsel %vm461, %v488, 0
      %v494 = vsel %vm465, %v489, 0
      %496 = vmatpush.bf16.msra.mxu0 0
      %497 = vmatpush.bf16.msra.mxu0 0
      %498 = vmatpush.bf16.msra.mxu0 0
      %499 = vmatpush.bf16.msra.mxu0 0
      %500 = vmatpush.bf16.msra.mxu0 0
      %501 = vmatpush.bf16.msra.mxu0 0
      %502 = vmatpush.bf16.msra.mxu0 0
      %503 = vmatpush.bf16.msra.mxu0 %v494
      %504 = vmatmul.bf16.gmra.mxu0 %v491
      %v505 = vpop.f32.mrf.mxu0
      %v506 = vadd.f32 %v459, %v505
      %v507 = vpop.f32.mrf.mxu0
      %v508 = vadd.f32 %v459, %v507
      %509 = vdwg.mxu0
      %510 = vst.msk [vmem:[#allocation2 + $0x20] sm:$0xff] %vm448, %v506
      %511 = vst.msk [vmem:[#allocation2 + $0x28] sm:$0xff] %vm448, %v508
      %v512 = vld [vmem:[#allocation2 + $0x6] sm:$0xff]
      %v513 = vld [vmem:[#allocation2 + $0xe] sm:$0xff]
      %v514 = vld [vmem:[#allocation2 + $0x16] sm:$0xff]
      %v515 = vld [vmem:[#allocation2 + $0x1e] sm:$0xff]
      %v516 = vld [vmem:[#allocation2 + $0x26] sm:$0xff]
      %v517 = vpack.c.bf16 %v513, %v512
      %v518 = vpack.c.bf16 %v515, %v514
      %v519 = vpack.c.bf16 %v516, %v516
      %v520 = vld [vmem:[%s3] sm:$0xf]
      %v521 = vld [vmem:[%s3 + $0x4] sm:$0xf]
      %v522 = vld [vmem:[%s3 + $0x8] sm:$0xf]
      %v523 = vld [vmem:[%s3 + $0xc] sm:$0xf]
      %v524 = vld [vmem:[#allocation2 + $0x7] sm:$0xff]
      %v525 = vld [vmem:[#allocation2 + $0xf] sm:$0xff]
      %v526 = vld [vmem:[#allocation2 + $0x17] sm:$0xff]
      %v527 = vld [vmem:[#allocation2 + $0x1f] sm:$0xff]
      %v528 = vld [vmem:[#allocation2 + $0x27] sm:$0xff]
      %v529 = vpack.c.bf16 %v525, %v524
      %v530 = vpack.c.bf16 %v527, %v526
      %v531 = vpack.c.bf16 %v528, %v528
      %v532 = vld [vmem:[%s3 + $0x10] sm:$0xf]
      %v533 = vld [vmem:[%s3 + $0x14] sm:$0xf]
      %v534 = vld [vmem:[%s3 + $0x18] sm:$0xf]
      %v535 = vld [vmem:[%s3 + $0x1c] sm:$0xf]
      %v540 = vunpack.c.l.b16 %v532
      %v541 = vunpack.c.l.b16 %v533
      %v542 = vunpack.c.l.b16 %v534
      %v543 = vunpack.c.l.b16 %v535
      %v544 = vpack.c.b16 %v541, %v540
      %v545 = vpack.c.b16 %v543, %v542
      %v549 = vsel %vm448, %v529, 0
      %v552 = vsel %vm448, %v530, 0
      %v555 = vsel %vm448, %v531, 0
      %557 = vmatpush.bf16.msra.mxu0 0
      %558 = vmatpush.bf16.msra.mxu0 0
      %559 = vmatpush.bf16.msra.mxu0 0
      %560 = vmatpush.bf16.msra.mxu0 0
      %561 = vmatpush.bf16.msra.mxu0 0
      %562 = vmatpush.bf16.msra.mxu0 0
      %563 = vmatpush.bf16.msra.mxu0 %v545
      %564 = vmatpush.bf16.msra.mxu0 %v544
      %565 = vmatmul.bf16.gmra.mxu0 %v549
      %v566 = vpop.f32.mrf.mxu0
      %v567 = vadd.f32 0.0, %v566
      %v568 = vpop.f32.mrf.mxu0
      %v569 = vadd.f32 0.0, %v568
      %570 = vmatmul.bf16.gmra.mxu0 %v552
      %v571 = vpop.f32.mrf.mxu0
      %v572 = vpop.f32.mrf.mxu0
      %v573 = vadd.f32 0.0, %v572
      %574 = vmatmul.bf16.gmra.mxu0 %v555
      %v575 = vpop.f32.mrf.mxu0
      %v576 = vadd.f32 0.0, %v575
      %v577 = vpop.f32.mrf.mxu0
      %578 = vdwg.mxu0
      %v583 = vunpack.c.l.b16 %v520
      %v584 = vunpack.c.l.b16 %v521
      %v585 = vunpack.c.l.b16 %v522
      %v586 = vunpack.c.l.b16 %v523
      %v587 = vpack.c.b16 %v584, %v583
      %v588 = vpack.c.b16 %v586, %v585
      %v592 = vsel %vm448, %v517, 0
      %v595 = vsel %vm448, %v518, 0
      %v598 = vsel %vm448, %v519, 0
      %600 = vmatpush.bf16.msra.mxu0 0
      %601 = vmatpush.bf16.msra.mxu0 0
      %602 = vmatpush.bf16.msra.mxu0 0
      %603 = vmatpush.bf16.msra.mxu0 0
      %604 = vmatpush.bf16.msra.mxu0 0
      %605 = vmatpush.bf16.msra.mxu0 0
      %606 = vmatpush.bf16.msra.mxu0 %v588
      %607 = vmatpush.bf16.msra.mxu0 %v587
      %608 = vmatmul.bf16.gmra.mxu0 %v592
      %v609 = vpop.f32.mrf.mxu0
      %v610 = vadd.f32 %v567, %v609
      %v611 = vpop.f32.mrf.mxu0
      %v612 = vadd.f32 %v569, %v611
      %613 = vmatmul.bf16.gmra.mxu0 %v595
      %v614 = vpop.f32.mrf.mxu0
      %v615 = vpop.f32.mrf.mxu0
      %v616 = vadd.f32 %v573, %v615
      %617 = vmatmul.bf16.gmra.mxu0 %v598
      %v618 = vpop.f32.mrf.mxu0
      %v619 = vadd.f32 %v576, %v618
      %v620 = vpop.f32.mrf.mxu0
      %621 = vdwg.mxu0
      %v622 = vld [vmem:[#allocation2 + $0x8] sm:$0xff]
      %v623 = vld [vmem:[#allocation2 + $0x10] sm:$0xff]
      %v624 = vld [vmem:[#allocation2 + $0x18] sm:$0xff]
      %v625 = vld [vmem:[#allocation2 + $0x20] sm:$0xff]
      %v626 = vld [vmem:[#allocation2 + $0x28] sm:$0xff]
      %v627 = vpack.c.bf16 %v623, %v622
      %v628 = vpack.c.bf16 %v625, %v624
      %v629 = vpack.c.bf16 %v626, %v626
      %v630 = vld [vmem:[%s3 + $0x20] sm:$0xf]
      %v631 = vld [vmem:[%s3 + $0x24] sm:$0xf]
      %v632 = vld [vmem:[%s3 + $0x28] sm:$0xf]
      %v633 = vld [vmem:[%s3 + $0x2c] sm:$0xf]
      %v638 = vunpack.c.l.b16 %v630
      %v639 = vunpack.c.l.b16 %v631
      %v640 = vunpack.c.l.b16 %v632
      %v641 = vunpack.c.l.b16 %v633
      %v642 = vpack.c.b16 %v639, %v638
      %v643 = vpack.c.b16 %v641, %v640
      %v647 = vsel %vm448, %v627, 0
      %v650 = vsel %vm448, %v628, 0
      %v653 = vsel %vm448, %v629, 0
      %655 = vmatpush.bf16.msra.mxu0 0
      %656 = vmatpush.bf16.msra.mxu0 0
      %657 = vmatpush.bf16.msra.mxu0 0
      %658 = vmatpush.bf16.msra.mxu0 0
      %659 = vmatpush.bf16.msra.mxu0 0
      %660 = vmatpush.bf16.msra.mxu0 0
      %661 = vmatpush.bf16.msra.mxu0 %v643
      %662 = vmatpush.bf16.msra.mxu0 %v642
      %663 = vmatmul.bf16.gmra.mxu0 %v647
      %v664 = vpop.f32.mrf.mxu0
      %v665 = vadd.f32 0.0, %v664
      %v666 = vpop.f32.mrf.mxu0
      %v667 = vadd.f32 0.0, %v666
      %668 = vmatmul.bf16.gmra.mxu0 %v650
      %v669 = vpop.f32.mrf.mxu0
      %v670 = vpop.f32.mrf.mxu0
      %v671 = vadd.f32 0.0, %v670
      %672 = vmatmul.bf16.gmra.mxu0 %v653
      %v673 = vpop.f32.mrf.mxu0
      %v674 = vadd.f32 0.0, %v673
      %v675 = vpop.f32.mrf.mxu0
      %676 = vdwg.mxu0
      %v677 = vadd.f32 %v610, %v665
      %v678 = vadd.f32 %v612, %v667
      %v679 = vadd.f32 %v616, %v671
      %v680 = vadd.f32 %v619, %v674
      %v681 = vld [vmem:[%s4] sm:$0x1]
      %v683 = vperm.slane %v681, 0
      %v685 = vadd.f32 %v677, %v683
      %v686 = vadd.f32 %v678, %v683
      %v687 = vadd.f32 %v679, %v683
      %v688 = vadd.f32 %v680, %v683
      %v689 = vmax.f32 %v685, 0.0
      %v690 = vmax.f32 %v686, 0.0
      %v691 = vmax.f32 %v687, 0.0
      %v692 = vmax.f32 %v688, 0.0
      %693 = vst.msk [vmem:[#allocation3 + $0x8] sm:$0xff] %vm448, %v689
      %694 = vst.msk [vmem:[#allocation3 + $0x10] sm:$0xff] %vm448, %v690
      %695 = vst.msk [vmem:[#allocation3 + $0x20] sm:$0xff] %vm448, %v691
      %696 = vst.msk [vmem:[#allocation3 + $0x28] sm:$0xff] %vm448, %v692
      %v697 = vld [vmem:[#allocation3 + $0x6] sm:$0xff]
      %v698 = vld [vmem:[#allocation3 + $0xe] sm:$0xff]
      %v699 = vld [vmem:[#allocation3 + $0x16] sm:$0xff]
      %v700 = vld [vmem:[#allocation3 + $0x1e] sm:$0xff]
      %v701 = vld [vmem:[#allocation3 + $0x26] sm:$0xff]
      %v702 = vpack.c.bf16 %v698, %v697
      %v703 = vpack.c.bf16 %v700, %v699
      %v704 = vpack.c.bf16 %v701, %v701
      %v705 = vld [vmem:[%s5] sm:$0xf]
      %v706 = vld [vmem:[%s5 + $0x4] sm:$0xf]
      %v707 = vld [vmem:[%s5 + $0x8] sm:$0xf]
      %v708 = vld [vmem:[%s5 + $0xc] sm:$0xf]
      %v709 = vld [vmem:[#allocation3 + $0x7] sm:$0xff]
      %v710 = vld [vmem:[#allocation3 + $0xf] sm:$0xff]
      %v711 = vld [vmem:[#allocation3 + $0x17] sm:$0xff]
      %v712 = vld [vmem:[#allocation3 + $0x1f] sm:$0xff]
      %v713 = vld [vmem:[#allocation3 + $0x27] sm:$0xff]
      %v714 = vpack.c.bf16 %v710, %v709
      %v715 = vpack.c.bf16 %v712, %v711
      %v716 = vpack.c.bf16 %v713, %v713
      %v717 = vld [vmem:[%s5 + $0x10] sm:$0xf]
      %v718 = vld [vmem:[%s5 + $0x14] sm:$0xf]
      %v719 = vld [vmem:[%s5 + $0x18] sm:$0xf]
      %v720 = vld [vmem:[%s5 + $0x1c] sm:$0xf]
      %v725 = vunpack.c.l.b16 %v717
      %v726 = vunpack.c.l.b16 %v718
      %v727 = vunpack.c.l.b16 %v719
      %v728 = vunpack.c.l.b16 %v720
      %v729 = vpack.c.b16 %v726, %v725
      %v730 = vpack.c.b16 %v728, %v727
      %v734 = vsel %vm448, %v714, 0
      %v737 = vsel %vm448, %v715, 0
      %v740 = vsel %vm448, %v716, 0
      %742 = vmatpush.bf16.msra.mxu0 0
      %743 = vmatpush.bf16.msra.mxu0 0
      %744 = vmatpush.bf16.msra.mxu0 0
      %745 = vmatpush.bf16.msra.mxu0 0
      %746 = vmatpush.bf16.msra.mxu0 0
      %747 = vmatpush.bf16.msra.mxu0 0
      %748 = vmatpush.bf16.msra.mxu0 %v730
      %749 = vmatpush.bf16.msra.mxu0 %v729
      %750 = vmatmul.bf16.gmra.mxu0 %v734
      %v751 = vpop.f32.mrf.mxu0
      %v752 = vadd.f32 0.0, %v751
      %v753 = vpop.f32.mrf.mxu0
      %v754 = vadd.f32 0.0, %v753
      %755 = vmatmul.bf16.gmra.mxu0 %v737
      %v756 = vpop.f32.mrf.mxu0
      %v757 = vpop.f32.mrf.mxu0
      %v758 = vadd.f32 0.0, %v757
      %759 = vmatmul.bf16.gmra.mxu0 %v740
      %v760 = vpop.f32.mrf.mxu0
      %v761 = vadd.f32 0.0, %v760
      %v762 = vpop.f32.mrf.mxu0
      %763 = vdwg.mxu0
      %v768 = vunpack.c.l.b16 %v705
      %v769 = vunpack.c.l.b16 %v706
      %v770 = vunpack.c.l.b16 %v707
      %v771 = vunpack.c.l.b16 %v708
      %v772 = vpack.c.b16 %v769, %v768
      %v773 = vpack.c.b16 %v771, %v770
      %v777 = vsel %vm448, %v702, 0
      %v780 = vsel %vm448, %v703, 0
      %v783 = vsel %vm448, %v704, 0
      %785 = vmatpush.bf16.msra.mxu0 0
      %786 = vmatpush.bf16.msra.mxu0 0
      %787 = vmatpush.bf16.msra.mxu0 0
      %788 = vmatpush.bf16.msra.mxu0 0
      %789 = vmatpush.bf16.msra.mxu0 0
      %790 = vmatpush.bf16.msra.mxu0 0
      %791 = vmatpush.bf16.msra.mxu0 %v773
      %792 = vmatpush.bf16.msra.mxu0 %v772
      %793 = vmatmul.bf16.gmra.mxu0 %v777
      %v794 = vpop.f32.mrf.mxu0
      %v795 = vadd.f32 %v752, %v794
      %v796 = vpop.f32.mrf.mxu0
      %v797 = vadd.f32 %v754, %v796
      %798 = vmatmul.bf16.gmra.mxu0 %v780
      %v799 = vpop.f32.mrf.mxu0
      %v800 = vpop.f32.mrf.mxu0
      %v801 = vadd.f32 %v758, %v800
      %802 = vmatmul.bf16.gmra.mxu0 %v783
      %v803 = vpop.f32.mrf.mxu0
      %v804 = vadd.f32 %v761, %v803
      %v805 = vpop.f32.mrf.mxu0
      %806 = vdwg.mxu0
      %v807 = vld [vmem:[#allocation3 + $0x8] sm:$0xff]
      %v808 = vld [vmem:[#allocation3 + $0x10] sm:$0xff]
      %v809 = vld [vmem:[#allocation3 + $0x18] sm:$0xff]
      %v810 = vld [vmem:[#allocation3 + $0x20] sm:$0xff]
      %v811 = vld [vmem:[#allocation3 + $0x28] sm:$0xff]
      %v812 = vpack.c.bf16 %v808, %v807
      %v813 = vpack.c.bf16 %v810, %v809
      %v814 = vpack.c.bf16 %v811, %v811
      %v815 = vld [vmem:[%s5 + $0x20] sm:$0xf]
      %v816 = vld [vmem:[%s5 + $0x24] sm:$0xf]
      %v817 = vld [vmem:[%s5 + $0x28] sm:$0xf]
      %v818 = vld [vmem:[%s5 + $0x2c] sm:$0xf]
      %v823 = vunpack.c.l.b16 %v815
      %v824 = vunpack.c.l.b16 %v816
      %v825 = vunpack.c.l.b16 %v817
      %v826 = vunpack.c.l.b16 %v818
      %v827 = vpack.c.b16 %v824, %v823
      %v828 = vpack.c.b16 %v826, %v825
      %v832 = vsel %vm448, %v812, 0
      %v835 = vsel %vm448, %v813, 0
      %v838 = vsel %vm448, %v814, 0
      %840 = vmatpush.bf16.msra.mxu0 0
      %841 = vmatpush.bf16.msra.mxu0 0
      %842 = vmatpush.bf16.msra.mxu0 0
      %843 = vmatpush.bf16.msra.mxu0 0
      %844 = vmatpush.bf16.msra.mxu0 0
      %845 = vmatpush.bf16.msra.mxu0 0
      %846 = vmatpush.bf16.msra.mxu0 %v828
      %847 = vmatpush.bf16.msra.mxu0 %v827
      %848 = vmatmul.bf16.gmra.mxu0 %v832
      %v849 = vpop.f32.mrf.mxu0
      %v850 = vadd.f32 0.0, %v849
      %v851 = vpop.f32.mrf.mxu0
      %v852 = vadd.f32 0.0, %v851
      %853 = vmatmul.bf16.gmra.mxu0 %v835
      %v854 = vpop.f32.mrf.mxu0
      %v855 = vpop.f32.mrf.mxu0
      %v856 = vadd.f32 0.0, %v855
      %857 = vmatmul.bf16.gmra.mxu0 %v838
      %v858 = vpop.f32.mrf.mxu0
      %v859 = vadd.f32 0.0, %v858
      %v860 = vpop.f32.mrf.mxu0
      %861 = vdwg.mxu0
      %v862 = vadd.f32 %v795, %v850
      %v863 = vadd.f32 %v797, %v852
      %v864 = vadd.f32 %v801, %v856
      %v865 = vadd.f32 %v804, %v859
      %v866 = vld [vmem:[%s6] sm:$0x1]
      %v868 = vperm.slane %v866, 0
      %v870 = vadd.f32 %v862, %v868
      %v871 = vadd.f32 %v863, %v868
      %v872 = vadd.f32 %v864, %v868
      %v873 = vadd.f32 %v865, %v868
      %v874 = vmax.f32 %v870, 0.0
      %v875 = vmax.f32 %v871, 0.0
      %v876 = vmax.f32 %v872, 0.0
      %v877 = vmax.f32 %v873, 0.0
      %v878 = vld [vmem:[#allocation2 + $0x8] sm:$0xff]
      %v879 = vld [vmem:[#allocation2 + $0x10] sm:$0xff]
      %v880 = vld [vmem:[#allocation2 + $0x20] sm:$0xff]
      %v881 = vld [vmem:[#allocation2 + $0x28] sm:$0xff]
      %v882 = vadd.f32 %v874, %v878
      %v883 = vadd.f32 %v875, %v879
      %v884 = vadd.f32 %v876, %v880
      %v885 = vadd.f32 %v877, %v881
      %v886 = vmax.f32 %v882, 0.0
      %v887 = vmax.f32 %v883, 0.0
      %v888 = vmax.f32 %v884, 0.0
      %v889 = vmax.f32 %v885, 0.0
      %890 = vst.msk [vmem:[#allocation2 + $0x8] sm:$0xff] %vm448, %v886
      %891 = vst.msk [vmem:[#allocation2 + $0x10] sm:$0xff] %vm448, %v887
      %892 = vst.msk [vmem:[#allocation2 + $0x20] sm:$0xff] %vm448, %v888
      %893 = vst.msk [vmem:[#allocation2 + $0x28] sm:$0xff] %vm448, %v889
      %v894 = vld [vmem:[#allocation2 + $0x4] sm:$0xff]
      %v895 = vld [vmem:[#allocation2 + $0xc] sm:$0xff]
      %v896 = vld [vmem:[#allocation2 + $0x14] sm:$0xff]
      %v897 = vld [vmem:[#allocation2 + $0x1c] sm:$0xff]
      %v898 = vld [vmem:[#allocation2 + $0x24] sm:$0xff]
      %v899 = vpack.c.bf16 %v895, %v894
      %v900 = vpack.c.bf16 %v897, %v896
      %v901 = vpack.c.bf16 %v898, %v898
      %v902 = vld [vmem:[%s7] sm:$0xf]
      %v903 = vld [vmem:[%s7 + $0x4] sm:$0xf]
      %v904 = vld [vmem:[%s7 + $0x8] sm:$0xf]
      %v905 = vld [vmem:[%s7 + $0xc] sm:$0xf]
      %v906 = vld [vmem:[#allocation2 + $0x6] sm:$0xff]
      %v907 = vld [vmem:[#allocation2 + $0xe] sm:$0xff]
      %v908 = vld [vmem:[#allocation2 + $0x16] sm:$0xff]
      %v909 = vld [vmem:[#allocation2 + $0x1e] sm:$0xff]
      %v910 = vld [vmem:[#allocation2 + $0x26] sm:$0xff]
      %v911 = vpack.c.bf16 %v907, %v906
      %v912 = vpack.c.bf16 %v909, %v908
      %v913 = vpack.c.bf16 %v910, %v910
      %v914 = vld [vmem:[%s7 + $0x10] sm:$0xf]
      %v915 = vld [vmem:[%s7 + $0x14] sm:$0xf]
      %v916 = vld [vmem:[%s7 + $0x18] sm:$0xf]
      %v917 = vld [vmem:[%s7 + $0x1c] sm:$0xf]
      %v922 = vunpack.c.l.b16 %v914
      %v923 = vunpack.c.l.b16 %v915
      %v924 = vunpack.c.l.b16 %v916
      %v925 = vunpack.c.l.b16 %v917
      %v926 = vpack.c.b16 %v923, %v922
      %v927 = vpack.c.b16 %v925, %v924
      %v931 = vsel %vm448, %v911, 0
      %v934 = vsel %vm448, %v912, 0
      %v937 = vsel %vm448, %v913, 0
      %939 = vmatpush.bf16.msra.mxu0 0
      %940 = vmatpush.bf16.msra.mxu0 0
      %941 = vmatpush.bf16.msra.mxu0 0
      %942 = vmatpush.bf16.msra.mxu0 0
      %943 = vmatpush.bf16.msra.mxu0 0
      %944 = vmatpush.bf16.msra.mxu0 0
      %945 = vmatpush.bf16.msra.mxu0 %v927
      %946 = vmatpush.bf16.msra.mxu0 %v926
      %947 = vmatmul.bf16.gmra.mxu0 %v931
      %v948 = vpop.f32.mrf.mxu0
      %v949 = vadd.f32 0.0, %v948
      %v950 = vpop.f32.mrf.mxu0
      %v951 = vadd.f32 0.0, %v950
      %952 = vmatmul.bf16.gmra.mxu0 %v934
      %v953 = vpop.f32.mrf.mxu0
      %v954 = vpop.f32.mrf.mxu0
      %v955 = vadd.f32 0.0, %v954
      %956 = vmatmul.bf16.gmra.mxu0 %v937
      %v957 = vpop.f32.mrf.mxu0
      %v958 = vadd.f32 0.0, %v957
      %v959 = vpop.f32.mrf.mxu0
      %960 = vdwg.mxu0
      %v965 = vunpack.c.l.b16 %v902
      %v966 = vunpack.c.l.b16 %v903
      %v967 = vunpack.c.l.b16 %v904
      %v968 = vunpack.c.l.b16 %v905
      %v969 = vpack.c.b16 %v966, %v965
      %v970 = vpack.c.b16 %v968, %v967
      %v974 = vsel %vm448, %v899, 0
      %v977 = vsel %vm448, %v900, 0
      %v980 = vsel %vm448, %v901, 0
      %982 = vmatpush.bf16.msra.mxu0 0
      %983 = vmatpush.bf16.msra.mxu0 0
      %984 = vmatpush.bf16.msra.mxu0 0
      %985 = vmatpush.bf16.msra.mxu0 0
      %986 = vmatpush.bf16.msra.mxu0 0
      %987 = vmatpush.bf16.msra.mxu0 0
      %988 = vmatpush.bf16.msra.mxu0 %v970
      %989 = vmatpush.bf16.msra.mxu0 %v969
      %990 = vmatmul.bf16.gmra.mxu0 %v974
      %v991 = vpop.f32.mrf.mxu0
      %v992 = vadd.f32 %v949, %v991
      %v993 = vpop.f32.mrf.mxu0
      %v994 = vadd.f32 %v951, %v993
      %995 = vmatmul.bf16.gmra.mxu0 %v977
      %v996 = vpop.f32.mrf.mxu0
      %v997 = vpop.f32.mrf.mxu0
      %v998 = vadd.f32 %v955, %v997
      %999 = vmatmul.bf16.gmra.mxu0 %v980
      %v1000 = vpop.f32.mrf.mxu0
      %v1001 = vadd.f32 %v958, %v1000
      %v1002 = vpop.f32.mrf.mxu0
      %1003 = vdwg.mxu0
      %v1004 = vld [vmem:[#allocation2 + $0x8] sm:$0xff]
      %v1005 = vld [vmem:[#allocation2 + $0x10] sm:$0xff]
      %v1006 = vld [vmem:[#allocation2 + $0x18] sm:$0xff]
      %v1007 = vld [vmem:[#allocation2 + $0x20] sm:$0xff]
      %v1008 = vld [vmem:[#allocation2 + $0x28] sm:$0xff]
      %v1009 = vpack.c.bf16 %v1005, %v1004
      %v1010 = vpack.c.bf16 %v1007, %v1006
      %v1011 = vpack.c.bf16 %v1008, %v1008
      %v1012 = vld [vmem:[%s7 + $0x20] sm:$0xf]
      %v1013 = vld [vmem:[%s7 + $0x24] sm:$0xf]
      %v1014 = vld [vmem:[%s7 + $0x28] sm:$0xf]
      %v1015 = vld [vmem:[%s7 + $0x2c] sm:$0xf]
      %v1020 = vunpack.c.l.b16 %v1012
      %v1021 = vunpack.c.l.b16 %v1013
      %v1022 = vunpack.c.l.b16 %v1014
      %v1023 = vunpack.c.l.b16 %v1015
      %v1024 = vpack.c.b16 %v1021, %v1020
      %v1025 = vpack.c.b16 %v1023, %v1022
      %v1029 = vsel %vm448, %v1009, 0
      %v1032 = vsel %vm448, %v1010, 0
      %v1035 = vsel %vm448, %v1011, 0
      %1037 = vmatpush.bf16.msra.mxu0 0
      %1038 = vmatpush.bf16.msra.mxu0 0
      %1039 = vmatpush.bf16.msra.mxu0 0
      %1040 = vmatpush.bf16.msra.mxu0 0
      %1041 = vmatpush.bf16.msra.mxu0 0
      %1042 = vmatpush.bf16.msra.mxu0 0
      %1043 = vmatpush.bf16.msra.mxu0 %v1025
      %1044 = vmatpush.bf16.msra.mxu0 %v1024
      %1045 = vmatmul.bf16.gmra.mxu0 %v1029
      %v1046 = vpop.f32.mrf.mxu0
      %v1047 = vadd.f32 0.0, %v1046
      %v1048 = vpop.f32.mrf.mxu0
      %v1049 = vadd.f32 0.0, %v1048
      %1050 = vmatmul.bf16.gmra.mxu0 %v1032
      %v1051 = vpop.f32.mrf.mxu0
      %v1052 = vpop.f32.mrf.mxu0
      %v1053 = vadd.f32 0.0, %v1052
      %1054 = vmatmul.bf16.gmra.mxu0 %v1035
      %v1055 = vpop.f32.mrf.mxu0
      %v1056 = vadd.f32 0.0, %v1055
      %v1057 = vpop.f32.mrf.mxu0
      %1058 = vdwg.mxu0
      %v1059 = vadd.f32 %v992, %v1047
      %v1060 = vadd.f32 %v994, %v1049
      %v1061 = vadd.f32 %v998, %v1053
      %v1062 = vadd.f32 %v1001, %v1056
      %v1063 = vld [vmem:[%s8] sm:$0x1]
      %v1065 = vperm.slane %v1063, 0
      %v1067 = vadd.f32 %v1059, %v1065
      %v1068 = vadd.f32 %v1060, %v1065
      %v1069 = vadd.f32 %v1061, %v1065
      %v1070 = vadd.f32 %v1062, %v1065
      %v1071 = vmax.f32 %v1067, 0.0
      %v1072 = vmax.f32 %v1068, 0.0
      %v1073 = vmax.f32 %v1069, 0.0
      %v1074 = vmax.f32 %v1070, 0.0
      %1075 = vst.msk [vmem:[#allocation3 + $0x8] sm:$0xff] %vm448, %v1071
      %1076 = vst.msk [vmem:[#allocation3 + $0x10] sm:$0xff] %vm448, %v1072
      %1077 = vst.msk [vmem:[#allocation3 + $0x20] sm:$0xff] %vm448, %v1073
      %1078 = vst.msk [vmem:[#allocation3 + $0x28] sm:$0xff] %vm448, %v1074
      %v1079 = vld [vmem:[#allocation3 + $0x4] sm:$0xff]
      %v1080 = vld [vmem:[#allocation3 + $0xc] sm:$0xff]
      %v1081 = vld [vmem:[#allocation3 + $0x14] sm:$0xff]
      %v1082 = vld [vmem:[#allocation3 + $0x1c] sm:$0xff]
      %v1083 = vld [vmem:[#allocation3 + $0x24] sm:$0xff]
      %v1084 = vpack.c.bf16 %v1080, %v1079
      %v1085 = vpack.c.bf16 %v1082, %v1081
      %v1086 = vpack.c.bf16 %v1083, %v1083
      %v1087 = vld [vmem:[%s9] sm:$0xf]
      %v1088 = vld [vmem:[%s9 + $0x4] sm:$0xf]
      %v1089 = vld [vmem:[%s9 + $0x8] sm:$0xf]
      %v1090 = vld [vmem:[%s9 + $0xc] sm:$0xf]
      %v1091 = vld [vmem:[#allocation3 + $0x6] sm:$0xff]
      %v1092 = vld [vmem:[#allocation3 + $0xe] sm:$0xff]
      %v1093 = vld [vmem:[#allocation3 + $0x16] sm:$0xff]
      %v1094 = vld [vmem:[#allocation3 + $0x1e] sm:$0xff]
      %v1095 = vld [vmem:[#allocation3 + $0x26] sm:$0xff]
      %v1096 = vpack.c.bf16 %v1092, %v1091
      %v1097 = vpack.c.bf16 %v1094, %v1093
      %v1098 = vpack.c.bf16 %v1095, %v1095
      %v1099 = vld [vmem:[%s9 + $0x10] sm:$0xf]
      %v1100 = vld [vmem:[%s9 + $0x14] sm:$0xf]
      %v1101 = vld [vmem:[%s9 + $0x18] sm:$0xf]
      %v1102 = vld [vmem:[%s9 + $0x1c] sm:$0xf]
      %v1107 = vunpack.c.l.b16 %v1099
      %v1108 = vunpack.c.l.b16 %v1100
      %v1109 = vunpack.c.l.b16 %v1101
      %v1110 = vunpack.c.l.b16 %v1102
      %v1111 = vpack.c.b16 %v1108, %v1107
      %v1112 = vpack.c.b16 %v1110, %v1109
      %v1116 = vsel %vm448, %v1096, 0
      %v1119 = vsel %vm448, %v1097, 0
      %v1122 = vsel %vm448, %v1098, 0
      %1124 = vmatpush.bf16.msra.mxu0 0
      %1125 = vmatpush.bf16.msra.mxu0 0
      %1126 = vmatpush.bf16.msra.mxu0 0
      %1127 = vmatpush.bf16.msra.mxu0 0
      %1128 = vmatpush.bf16.msra.mxu0 0
      %1129 = vmatpush.bf16.msra.mxu0 0
      %1130 = vmatpush.bf16.msra.mxu0 %v1112
      %1131 = vmatpush.bf16.msra.mxu0 %v1111
      %1132 = vmatmul.bf16.gmra.mxu0 %v1116
      %v1133 = vpop.f32.mrf.mxu0
      %v1134 = vadd.f32 0.0, %v1133
      %v1135 = vpop.f32.mrf.mxu0
      %v1136 = vadd.f32 0.0, %v1135
      %1137 = vmatmul.bf16.gmra.mxu0 %v1119
      %v1138 = vpop.f32.mrf.mxu0
      %v1139 = vpop.f32.mrf.mxu0
      %v1140 = vadd.f32 0.0, %v1139
      %1141 = vmatmul.bf16.gmra.mxu0 %v1122
      %v1142 = vpop.f32.mrf.mxu0
      %v1143 = vadd.f32 0.0, %v1142
      %v1144 = vpop.f32.mrf.mxu0
      %1145 = vdwg.mxu0
      %v1150 = vunpack.c.l.b16 %v1087
      %v1151 = vunpack.c.l.b16 %v1088
      %v1152 = vunpack.c.l.b16 %v1089
      %v1153 = vunpack.c.l.b16 %v1090
      %v1154 = vpack.c.b16 %v1151, %v1150
      %v1155 = vpack.c.b16 %v1153, %v1152
      %v1159 = vsel %vm448, %v1084, 0
      %v1162 = vsel %vm448, %v1085, 0
      %v1165 = vsel %vm448, %v1086, 0
      %1167 = vmatpush.bf16.msra.mxu0 0
      %1168 = vmatpush.bf16.msra.mxu0 0
      %1169 = vmatpush.bf16.msra.mxu0 0
      %1170 = vmatpush.bf16.msra.mxu0 0
      %1171 = vmatpush.bf16.msra.mxu0 0
      %1172 = vmatpush.bf16.msra.mxu0 0
      %1173 = vmatpush.bf16.msra.mxu0 %v1155
      %1174 = vmatpush.bf16.msra.mxu0 %v1154
      %1175 = vmatmul.bf16.gmra.mxu0 %v1159
      %v1176 = vpop.f32.mrf.mxu0
      %v1177 = vadd.f32 %v1134, %v1176
      %v1178 = vpop.f32.mrf.mxu0
      %v1179 = vadd.f32 %v1136, %v1178
      %1180 = vmatmul.bf16.gmra.mxu0 %v1162
      %v1181 = vpop.f32.mrf.mxu0
      %v1182 = vpop.f32.mrf.mxu0
      %v1183 = vadd.f32 %v1140, %v1182
      %1184 = vmatmul.bf16.gmra.mxu0 %v1165
      %v1185 = vpop.f32.mrf.mxu0
      %v1186 = vadd.f32 %v1143, %v1185
      %v1187 = vpop.f32.mrf.mxu0
      %1188 = vdwg.mxu0
      %v1189 = vld [vmem:[#allocation3 + $0x8] sm:$0xff]
      %v1190 = vld [vmem:[#allocation3 + $0x10] sm:$0xff]
      %v1191 = vld [vmem:[#allocation3 + $0x18] sm:$0xff]
      %v1192 = vld [vmem:[#allocation3 + $0x20] sm:$0xff]
      %v1193 = vld [vmem:[#allocation3 + $0x28] sm:$0xff]
      %v1194 = vpack.c.bf16 %v1190, %v1189
      %v1195 = vpack.c.bf16 %v1192, %v1191
      %v1196 = vpack.c.bf16 %v1193, %v1193
      %v1197 = vld [vmem:[%s9 + $0x20] sm:$0xf]
      %v1198 = vld [vmem:[%s9 + $0x24] sm:$0xf]
      %v1199 = vld [vmem:[%s9 + $0x28] sm:$0xf]
      %v1200 = vld [vmem:[%s9 + $0x2c] sm:$0xf]
      %v1205 = vunpack.c.l.b16 %v1197
      %v1206 = vunpack.c.l.b16 %v1198
      %v1207 = vunpack.c.l.b16 %v1199
      %v1208 = vunpack.c.l.b16 %v1200
      %v1209 = vpack.c.b16 %v1206, %v1205
      %v1210 = vpack.c.b16 %v1208, %v1207
      %v1214 = vsel %vm448, %v1194, 0
      %v1217 = vsel %vm448, %v1195, 0
      %v1220 = vsel %vm448, %v1196, 0
      %1222 = vmatpush.bf16.msra.mxu0 0
      %1223 = vmatpush.bf16.msra.mxu0 0
      %1224 = vmatpush.bf16.msra.mxu0 0
      %1225 = vmatpush.bf16.msra.mxu0 0
      %1226 = vmatpush.bf16.msra.mxu0 0
      %1227 = vmatpush.bf16.msra.mxu0 0
      %1228 = vmatpush.bf16.msra.mxu0 %v1210
      %1229 = vmatpush.bf16.msra.mxu0 %v1209
      %1230 = vmatmul.bf16.gmra.mxu0 %v1214
      %v1231 = vpop.f32.mrf.mxu0
      %v1232 = vadd.f32 0.0, %v1231
      %v1233 = vpop.f32.mrf.mxu0
      %v1234 = vadd.f32 0.0, %v1233
      %1235 = vmatmul.bf16.gmra.mxu0 %v1217
      %v1236 = vpop.f32.mrf.mxu0
      %v1237 = vpop.f32.mrf.mxu0
      %v1238 = vadd.f32 0.0, %v1237
      %1239 = vmatmul.bf16.gmra.mxu0 %v1220
      %v1240 = vpop.f32.mrf.mxu0
      %v1241 = vadd.f32 0.0, %v1240
      %v1242 = vpop.f32.mrf.mxu0
      %1243 = vdwg.mxu0
      %v1244 = vadd.f32 %v1177, %v1232
      %v1245 = vadd.f32 %v1179, %v1234
      %v1246 = vadd.f32 %v1183, %v1238
      %v1247 = vadd.f32 %v1186, %v1241
      %v1248 = vld [vmem:[%s10] sm:$0x1]
      %v1250 = vperm.slane %v1248, 0
      %v1252 = vadd.f32 %v1244, %v1250
      %v1253 = vadd.f32 %v1245, %v1250
      %v1254 = vadd.f32 %v1246, %v1250
      %v1255 = vadd.f32 %v1247, %v1250
      %v1256 = vmax.f32 %v1252, 0.0
      %v1257 = vmax.f32 %v1253, 0.0
      %v1258 = vmax.f32 %v1254, 0.0
      %v1259 = vmax.f32 %v1255, 0.0
      %v1260 = vld [vmem:[#allocation2 + $0x8] sm:$0xff]
      %v1261 = vld [vmem:[#allocation2 + $0x10] sm:$0xff]
      %v1262 = vld [vmem:[#allocation2 + $0x20] sm:$0xff]
      %v1263 = vld [vmem:[#allocation2 + $0x28] sm:$0xff]
      %v1264 = vadd.f32 %v1256, %v1260
      %v1265 = vadd.f32 %v1257, %v1261
      %v1266 = vadd.f32 %v1258, %v1262
      %v1267 = vadd.f32 %v1259, %v1263
      %v1268 = vmax.f32 %v1264, 0.0
      %v1269 = vmax.f32 %v1265, 0.0
      %v1270 = vmax.f32 %v1266, 0.0
      %v1271 = vmax.f32 %v1267, 0.0
      %1272 = vst.msk [vmem:[#allocation2 + $0x8] sm:$0xff] %vm448, %v1268
      %1273 = vst.msk [vmem:[#allocation2 + $0x10] sm:$0xff] %vm448, %v1269
      %1274 = vst.msk [vmem:[#allocation2 + $0x20] sm:$0xff] %vm448, %v1270
      %1275 = vst.msk [vmem:[#allocation2 + $0x28] sm:$0xff] %vm448, %v1271
      %v1276 = vld [vmem:[%s12] sm:$0x1]
      %v1277 = vld [vmem:[#allocation2 + $0x10] sm:$0xff]
      %v1278 = vpack.c.bf16 %v1277, %v1277
      %v1279 = vld [vmem:[%s11] sm:$0xf]
      %v1280 = vld [vmem:[%s11 + $0x4] sm:$0xf]
      %v1281 = vld [vmem:[%s11 + $0x8] sm:$0xf]
      %v1282 = vld [vmem:[%s11 + $0xc] sm:$0xf]
      %v1284 = vperm.slane %v1276, 0
      %v1290 = vunpack.c.l.b16 %v1279
      %v1291 = vunpack.c.l.b16 %v1280
      %v1292 = vunpack.c.l.b16 %v1281
      %v1293 = vunpack.c.l.b16 %v1282
      %v1294 = vpack.c.b16 %v1291, %v1290
      %v1295 = vpack.c.b16 %v1293, %v1292
      %v1299 = vsel %vm448, %v1278, 0
      %1301 = vmatpush.bf16.msra.mxu0 0
      %1302 = vmatpush.bf16.msra.mxu0 0
      %1303 = vmatpush.bf16.msra.mxu0 0
      %1304 = vmatpush.bf16.msra.mxu0 0
      %1305 = vmatpush.bf16.msra.mxu0 0
      %1306 = vmatpush.bf16.msra.mxu0 0
      %1307 = vmatpush.bf16.msra.mxu0 %v1295
      %1308 = vmatpush.bf16.msra.mxu0 %v1294
      %1309 = vmatmul.bf16.gmra.mxu0 %v1299
      %v1310 = vpop.f32.mrf.mxu0
      %v1311 = vadd.f32 %v1284, %v1310
      %v1312 = vpop.f32.mrf.mxu0
      %1313 = vdwg.mxu0
      %1314 = vst.msk [vmem:[%s445] sm:$0xff] %vm461, %v1311
      %v1315 = vld [vmem:[#allocation2 + $0x28] sm:$0xff]
      %v1316 = vpack.c.bf16 %v1315, %v1315
      %v1317 = vld [vmem:[%s11] sm:$0xf]
      %v1318 = vld [vmem:[%s11 + $0x4] sm:$0xf]
      %v1319 = vld [vmem:[%s11 + $0x8] sm:$0xf]
      %v1320 = vld [vmem:[%s11 + $0xc] sm:$0xf]
      %v1325 = vunpack.c.l.b16 %v1317
      %v1326 = vunpack.c.l.b16 %v1318
      %v1327 = vunpack.c.l.b16 %v1319
      %v1328 = vunpack.c.l.b16 %v1320
      %v1329 = vpack.c.b16 %v1326, %v1325
      %v1330 = vpack.c.b16 %v1328, %v1327
      %v1334 = vsel %vm448, %v1316, 0
      %1336 = vmatpush.bf16.msra.mxu0 0
      %1337 = vmatpush.bf16.msra.mxu0 0
      %1338 = vmatpush.bf16.msra.mxu0 0
      %1339 = vmatpush.bf16.msra.mxu0 0
      %1340 = vmatpush.bf16.msra.mxu0 0
      %1341 = vmatpush.bf16.msra.mxu0 0
      %1342 = vmatpush.bf16.msra.mxu0 %v1330
      %1343 = vmatpush.bf16.msra.mxu0 %v1329
      %1344 = vmatmul.bf16.gmra.mxu0 %v1334
      %v1345 = vpop.f32.mrf.mxu0
      %v1346 = vadd.f32 %v1284, %v1345
      %v1347 = vpop.f32.mrf.mxu0
      %1348 = vdwg.mxu0
      %s1349 = scalar_lea.vmem %s445, 8
      %1350 = vst.msk [vmem:[%s1349] sm:$0xff] %vm461, %v1346
      %s1351 = smul.u32 2, %s24
      %p1352 = scmp.lt.s32.totalorder %s1351, 3
      %s1353 = scalar_select %p1352, %s1351, 3
      %s1354 = smul.addr %s1353, 8
      %s1355 = scalar_lea.vmem %s13, %s1354
      // Predicated region
      $region73: #{tpu_custom_call.1} parent=71 // pred_check
        %p1356 = pneg %p320
      $region74: #{tpu_custom_call.1} parent=71 // pred_check_branch
        %1358 = sbr.rel (%p1356) target = $region76
      $region75: #{tpu_custom_call.1} parent=71 // pred_region
        %s1359 = smul.u32 2, %s24
      $region76: #{tpu_custom_call.1} parent=71 // pred_fallthru
        _
    $region72: #{tpu_custom_call.1} parent=5 // pred_fallthru
      _
    %p1360 = scmp.le.s32.totalorder 2, %s19
    // Predicated region
    $region77: #{tpu_custom_call.1} parent=5 // pred_check
      %p1361 = pneg %p1360
    $region78: #{tpu_custom_call.1} parent=5 // pred_check_branch
      %1363 = sbr.rel (%p1361) target = $region80
    $region79: #{tpu_custom_call.1} parent=5 // pred_region
      %s1364 = ssub.s32 %s19, 2
      // Predicated region
      $region81: #{tpu_custom_call.1} parent=79 // pred_check
        %p1365 = pneg %p326
      $region82: #{tpu_custom_call.1} parent=79 // pred_check_branch
        %1367 = sbr.rel (%p1365) target = $region84
      $region83: #{tpu_custom_call.1} parent=79 // pred_region
        %s1368 = smul.u32 2, %s25
        %p1369 = scmp.lt.s32.totalorder %s1368, 3
        %s1370 = scalar_select %p1369, %s1368, 3
        %s1371 = smul.addr %s1370, 8
        %s1372 = scalar_lea.vmem %s13, %s1371
      $region84: #{tpu_custom_call.1} parent=79 // pred_fallthru
        _
    $region80: #{tpu_custom_call.1} parent=5 // pred_fallthru
      _
  $region6: #{tpu_custom_call.1} parent=0 // loop_footer
    %s23 = sadd.s32 1, %s19
  $region7: #{tpu_custom_call.1} parent=0 // loop_footer_branch
    %18 = sbr.rel target = $region3
  $region8: #{tpu_custom_call.1} parent=0 // loop_exit
    _

</llo_original>
